<compile_context>
chip_gen: v6e
topology: v6e:2x2x1
jax: 0.10.0
libtpu: 0.0.40
codegen_flags: <defaults>
</compile_context>

<pallas_src>
import jax
import jax.numpy as jnp
from jax import lax
from jax.experimental import pallas as pl
from jax.experimental.pallas import tpu as pltpu


# ----------------------------------------------------------------------------
# One-time preprocessing helpers (hoisted out of the per-call forward)
# ----------------------------------------------------------------------------
def _interp_matrix(size_in):
    """(2*size_in, size_in) bilinear x2 interpolation matrix
    (PyTorch nn.Upsample, align_corners=False semantics)."""
    size_out = 2 * size_in
    out = jnp.arange(size_out, dtype=jnp.float32)
    src = jnp.maximum((out + 0.5) / 2.0 - 0.5, 0.0)
    i0 = jnp.floor(src).astype(jnp.int32)
    i1 = jnp.minimum(i0 + 1, size_in - 1)
    lam = src - i0.astype(jnp.float32)
    m = (jax.nn.one_hot(i0, size_in, dtype=jnp.float32) * (1.0 - lam)[:, None]
         + jax.nn.one_hot(i1, size_in, dtype=jnp.float32) * lam[:, None])
    return m                                                 # entries in {0,.25,.75,1}


def _band_weights_cat(w_hwio, W):
    """(3,3,Ci,Co) conv weights -> (W*Ci, 3*W*Co) banded matrix.

    Width taps (dx) and width zero-padding are folded into the band; the three
    row taps (dy) are concatenated along the output axis so a single matmul
    produces all three row-tap partials at once."""
    _, _, Ci, Co = w_hwio.shape
    idx = jnp.arange(W)
    sel = jnp.stack(
        [(idx[:, None] == (idx[None, :] + dx - 1)) for dx in range(3)],
        axis=0).astype(jnp.float32)                          # (3, W_in, W_out)
    band = jnp.einsum('xuw,dxmc->dumwc', sel, w_hwio.astype(jnp.float32))
    band = band.reshape(3, W * Ci, W * Co)
    return jnp.concatenate([band[0], band[1], band[2]], axis=-1)


def _upsample_fused_weights_cat(w1a_hwio, W1):
    """Fold the width-direction bilinear x2 upsample (Uw) together with the
    conv width taps into a single (W1*C1, 3*W*Cmid) matrix for the x1-channel
    part of conv1 (dy taps concatenated along the output axis)."""
    _, _, C1, Cmid = w1a_hwio.shape
    W = 2 * W1
    Uw = _interp_matrix(W1)                                  # (W, W1)
    Uwp = jnp.concatenate([jnp.zeros((1, W1), jnp.float32), Uw,
                           jnp.zeros((1, W1), jnp.float32)], axis=0)
    # T[dx, w, j] = Uw[w + dx - 1, j]  (zero rows implement the W zero-pad)
    T = jnp.stack([Uwp[dx:dx + W] for dx in range(3)], axis=0)   # (3, W, W1)
    G = jnp.einsum('xwj,dxcm->djcwm', T, w1a_hwio.astype(jnp.float32))
    G = G.reshape(3, W1 * C1, W * Cmid)
    return jnp.concatenate([G[0], G[1], G[2]], axis=-1)      # (W1*C1, 3*W*Cmid)


def _pick_batch_tile(N, H, target_rows=128):
    """Images per grid step: target M = Nb*H ~ 128 rows (fills the MXU M dim),
    constrained to a divisor of N."""
    nb = max(1, min(N, max(1, target_rows // H)))
    while N % nb:
        nb -= 1
    return nb


# ----------------------------------------------------------------------------
# Parameters (deterministic init) with conv1-bias/BN folded into scale & shift
# ----------------------------------------------------------------------------
def init_params(key, in_channels, middle_channels, out_channels):
    k1, k2, k3, k4, kg, kb, krm, krv = jax.random.split(key, 8)
    w1 = 0.1 * jax.random.normal(k1, (3, 3, in_channels, middle_channels), jnp.float32)
    b1 = 0.1 * jax.random.normal(k2, (middle_channels,), jnp.float32)
    gamma = 1.0 + 0.1 * jax.random.normal(kg, (middle_channels,), jnp.float32)
    beta = 0.1 * jax.random.normal(kb, (middle_channels,), jnp.float32)
    r_mean = 0.1 * jax.random.normal(krm, (middle_channels,), jnp.float32)
    r_var = 1.0 + 0.1 * jax.random.uniform(krv, (middle_channels,), jnp.float32)
    eps = 1e-5
    w2 = 0.1 * jax.random.normal(k3, (3, 3, middle_channels, out_channels), jnp.float32)
    b2 = 0.1 * jax.random.normal(k4, (out_channels,), jnp.float32)

    scale1 = gamma / jnp.sqrt(r_var + eps)
    bias1 = beta + scale1 * (b1 - r_mean)
    return {"w1": w1, "scale1": scale1, "bias1": bias1, "w2": w2, "b2": b2}


def prepare_params(p, *, C1, H1, W1, Nb):
    """One-time preprocessing of the DeConv parameters into lane-dense,
    MXU-friendly kernel operands (runs once, not per forward call)."""
    Cin = p["w1"].shape[2]
    C2 = Cin - C1
    Cmid = p["w1"].shape[3]
    Cout = p["w2"].shape[3]
    H, W = 2 * H1, 2 * W1

    Uh = _interp_matrix(H1)                                  # (H, H1)
    uhd = jnp.kron(jnp.eye(Nb, dtype=jnp.float32), Uh)       # (Nb*H, Nb*H1)

    g1 = _upsample_fused_weights_cat(p["w1"][:, :, :C1, :], W1)   # (W1*C1, 3*W*Cmid)
    wb1 = _band_weights_cat(p["w1"][:, :, C1:, :], W)             # (W*C2, 3*W*Cmid)
    w2c = _band_weights_cat(p["w2"], W)                           # (W*Cmid, 3*W*Cout)

    return {
        "uhd": uhd.astype(jnp.bfloat16),
        "g1": g1.astype(jnp.bfloat16),
        "wb1": wb1.astype(jnp.bfloat16),
        "w2c": w2c.astype(jnp.bfloat16),
        "s1": jnp.tile(p["scale1"], W).reshape(1, W * Cmid).astype(jnp.float32),
        "b1": jnp.tile(p["bias1"], W).reshape(1, W * Cmid).astype(jnp.float32),
        "b2": jnp.tile(p["b2"], W).reshape(1, W * Cout).astype(jnp.float32),
    }


# ----------------------------------------------------------------------------
# Forward: NCHW in / NCHW out (matches the PyTorch module interface)
# ----------------------------------------------------------------------------
def make_forward(prep, Nb):
    uhd, g1, wb1, w2c = prep["uhd"], prep["g1"], prep["wb1"], prep["w2c"]
    s1, b1, b2 = prep["s1"], prep["b1"], prep["b2"]

    @jax.jit
    def fwd(x1, x2):
        N, C1, H1, W1 = x1.shape
        _, C2, H, W = x2.shape
        assert (H, W) == (2 * H1, 2 * W1) and N % Nb == 0
        M = Nb * H
        WCmid = s1.shape[1]
        WCout = b2.shape[1]
        Cout = WCout // W
        assert uhd.shape == (M, Nb * H1)
        assert g1.shape == (W1 * C1, 3 * WCmid)
        assert wb1.shape == (W * C2, 3 * WCmid)
        assert w2c.shape == (WCmid, 3 * WCout)

        # Channels-last, lane-dense row slabs, already bf16 (halves DMA bytes).
        # In an NHWC end-to-end pipeline these transposes disappear; they are
        # kept only so the public interface matches the NCHW PyTorch module.
        x1r = jnp.transpose(x1, (0, 2, 3, 1)).reshape(N * H1, W1 * C1)
        x1r = x1r.astype(jnp.bfloat16)
        x2r = jnp.transpose(x2, (0, 2, 3, 1)).reshape(N * H, W * C2)
        x2r = x2r.astype(jnp.bfloat16)

        def kernel(x1_ref, x2_ref, uhd_ref, g1_ref, wb1_ref,
                   s1_ref, b1_ref, w2_ref, b2_ref, o_ref):
            # per-image local row index of every output row in this block
            lrow1 = lax.broadcasted_iota(jnp.int32, (M, WCmid), 0) % H
            lrow2 = lax.broadcasted_iota(jnp.int32, (M, WCout), 0) % H

            # ---- conv1: all three row taps from two fat MXU matmuls --------
            # x1 path: rows are bilinearly upsampled by the tiny block-diag Uh
            # matmul; width upsample + width taps are folded into g1.
            a = jnp.dot(uhd_ref[...], x1_ref[...],
                        preferred_element_type=jnp.float32)
            p = jnp.dot(a.astype(jnp.bfloat16), g1_ref[...],
                        preferred_element_type=jnp.float32)
            # x2 (skip connection) path: banded weights over the full width.
            p = p + jnp.dot(x2_ref[...], wb1_ref[...],
                            preferred_element_type=jnp.float32)

            # combine the dy taps with XLU rolls (zero-masked at image edges)
            p0 = p[:, :WCmid]
            p1 = p[:, WCmid:2 * WCmid]
            p2 = p[:, 2 * WCmid:]
            y = (p1
                 + jnp.where(lrow1 != 0, pltpu.roll(p0, 1, axis=0), 0.0)
                 + jnp.where(lrow1 != H - 1,
                             pltpu.roll(p2, M - 1, axis=0), 0.0))

            # folded BatchNorm (eval) + ReLU epilogue in f32
            h = jnp.maximum(y * s1_ref[...] + b1_ref[...], 0.0)

            # ---- conv2: one fat MXU matmul, K = W*Cmid ---------------------
            r = jnp.dot(h.astype(jnp.bfloat16), w2_ref[...],
                        preferred_element_type=jnp.float32)
            r0 = r[:, :WCout]
            r1 = r[:, WCout:2 * WCout]
            r2 = r[:, 2 * WCout:]
            out = (r1
                   + jnp.where(lrow2 != 0, pltpu.roll(r0, 1, axis=0), 0.0)
                   + jnp.where(lrow2 != H - 1,
                               pltpu.roll(r2, M - 1, axis=0), 0.0))

            # lane-dense store: W*Cout is a multiple of 128 here -> unmasked
            o_ref[...] = out + b2_ref[...]

        out_rows = pl.pallas_call(
            kernel,
            out_shape=jax.ShapeDtypeStruct((N * H, WCout), jnp.float32),
            grid=(N // Nb,),
            in_specs=[
                pl.BlockSpec((Nb * H1, W1 * C1), lambda n: (n, 0)),
                pl.BlockSpec((M, W * C2), lambda n: (n, 0)),
                pl.BlockSpec(uhd.shape, lambda n: (0, 0)),
                pl.BlockSpec(g1.shape, lambda n: (0, 0)),
                pl.BlockSpec(wb1.shape, lambda n: (0, 0)),
                pl.BlockSpec(s1.shape, lambda n: (0, 0)),
                pl.BlockSpec(b1.shape, lambda n: (0, 0)),
                pl.BlockSpec(w2c.shape, lambda n: (0, 0)),
                pl.BlockSpec(b2.shape, lambda n: (0, 0)),
            ],
            out_specs=pl.BlockSpec((M, WCout), lambda n: (n, 0)),
            compiler_params=pltpu.CompilerParams(
                dimension_semantics=("parallel",)),   # v7x: shard batch blocks
        )(x1r, x2r, uhd, g1, wb1, s1, b1, w2c, b2)

        out = out_rows.reshape(N, H, W, Cout)
        return jnp.transpose(out, (0, 3, 1, 2))               # back to NCHW

    return fwd


# ----------------------------------------------------------------------------
# Pure-JAX reference (gather-lerp upsample + lax.conv), with matching bf16
# rounding of the matmul operands.
# ----------------------------------------------------------------------------
def bilinear_upsample_x2(x):
    N, C, H, W = x.shape

    def axis_idx(size):
        out = jnp.arange(2 * size, dtype=jnp.float32)
        src = jnp.maximum((out + 0.5) / 2.0 - 0.5, 0.0)
        i0 = jnp.floor(src).astype(jnp.int32)
        i1 = jnp.minimum(i0 + 1, size - 1)
        lam = src - i0.astype(jnp.float32)
        return i0, i1, lam

    hi0, hi1, hl = axis_idx(H)
    wi0, wi1, wl = axis_idx(W)
    xh = (x[:, :, hi0, :] * (1.0 - hl)[None, None, :, None]
          + x[:, :, hi1, :] * hl[None, None, :, None])
    xhw = (xh[:, :, :, wi0] * (1.0 - wl)[None, None, None, :]
           + xh[:, :, :, wi1] * wl[None, None, None, :])
    return xhw


def _round_bf16(a):
    return a.astype(jnp.bfloat16).astype(jnp.float32)


def deconv_reference(x1, x2, p):
    up = bilinear_upsample_x2(x1)
    x = _round_bf16(jnp.concatenate([up, x2], axis=1))
    w1 = _round_bf16(jnp.transpose(p["w1"], (3, 2, 0, 1)))     # OIHW
    y = lax.conv_general_dilated(x, w1, (1, 1), ((1, 1), (1, 1)),
                                 dimension_numbers=("NCHW", "OIHW", "NCHW"),
                                 precision=lax.Precision.HIGHEST)
    y = y * p["scale1"].reshape(1, -1, 1, 1) + p["bias1"].reshape(1, -1, 1, 1)
    y = _round_bf16(jnp.maximum(y, 0.0))
    w2 = _round_bf16(jnp.transpose(p["w2"], (3, 2, 0, 1)))
    y = lax.conv_general_dilated(y, w2, (1, 1), ((1, 1), (1, 1)),
                                 dimension_numbers=("NCHW", "OIHW", "NCHW"),
                                 precision=lax.Precision.HIGHEST)
    return y + p["b2"].reshape(1, -1, 1, 1)


if __name__ == "__main__":
    key = jax.random.PRNGKey(0)
    k_x1, k_x2, k_p = jax.random.split(key, 3)

    # x1 is the low-res feature map (upsampled x2), x2 the skip connection.
    N, C1, C2, H1, W1 = 2, 4, 4, 8, 8
    in_channels = C1 + C2          # 8
    middle_channels = 16
    out_channels = 8
    H, W = 2 * H1, 2 * W1          # 16, 16

    x1 = jax.random.normal(k_x1, (N, C1, H1, W1), jnp.float32)
    x2 = jax.random.normal(k_x2, (N, C2, H, W), jnp.float32)
    params = init_params(k_p, in_channels, middle_channels, out_channels)

    Nb = _pick_batch_tile(N, H)                    # images per grid step
    prep = prepare_params(params, C1=C1, H1=H1, W1=W1, Nb=Nb)
    fwd = make_forward(prep, Nb)

    out = jax.block_until_ready(fwd(x1, x2))
    ref = jax.block_until_ready(deconv_reference(x1, x2, params))

    assert out.shape == (N, out_channels, H, W), out.shape
    max_err = float(jnp.max(jnp.abs(out - ref)))
    assert jnp.allclose(out, ref, atol=2e-2, rtol=2e-2), max_err
    print("KERNEL_OK")
</pallas_src>

<mosaic_0001>
module attributes {stable_mosaic.version = 11 : i64} {
  func.func @kernel(%arg0: i32, %arg1: memref<16x32xbf16, #tpu.memory_space<vmem>>, %arg2: memref<32x64xbf16, #tpu.memory_space<vmem>>, %arg3: memref<32x16xbf16, #tpu.memory_space<vmem>>, %arg4: memref<32x768xbf16, #tpu.memory_space<vmem>>, %arg5: memref<64x768xbf16, #tpu.memory_space<vmem>>, %arg6: memref<1x256xf32, #tpu.memory_space<vmem>>, %arg7: memref<1x256xf32, #tpu.memory_space<vmem>>, %arg8: memref<256x384xbf16, #tpu.memory_space<vmem>>, %arg9: memref<1x128xf32, #tpu.memory_space<vmem>>, %arg10: memref<32x128xf32, #tpu.memory_space<vmem>>) attributes {dimension_semantics = [#tpu.dimension_semantics<parallel>], iteration_bounds = array<i64: 1>, scalar_prefetch = 0 : i64, scratch_operands = 0 : i64, tpu.core_type = #tpu.core_type<tc>, window_params = [{transform_indices = @transform_0, window_bounds = array<i64: 16, 32>}, {transform_indices = @transform_1, window_bounds = array<i64: 32, 64>}, {pipeline_mode = #tpu.pipeline_mode<synchronous>, transform_indices = @transform_2, window_bounds = array<i64: 32, 16>}, {pipeline_mode = #tpu.pipeline_mode<synchronous>, transform_indices = @transform_3, window_bounds = array<i64: 32, 768>}, {pipeline_mode = #tpu.pipeline_mode<synchronous>, transform_indices = @transform_4, window_bounds = array<i64: 64, 768>}, {pipeline_mode = #tpu.pipeline_mode<synchronous>, transform_indices = @transform_5, window_bounds = array<i64: 1, 256>}, {pipeline_mode = #tpu.pipeline_mode<synchronous>, transform_indices = @transform_6, window_bounds = array<i64: 1, 256>}, {pipeline_mode = #tpu.pipeline_mode<synchronous>, transform_indices = @transform_7, window_bounds = array<i64: 256, 384>}, {pipeline_mode = #tpu.pipeline_mode<synchronous>, transform_indices = @transform_8, window_bounds = array<i64: 1, 128>}, {transform_indices = @transform_9, window_bounds = array<i64: 32, 128>}]} {
    %0 = tpu.iota {dimensions = array<i32: 0>} : vector<32x256xi32>
    %c16_i32 = arith.constant 16 : i32
    %c0_i32 = arith.constant 0 : i32
    %1 = arith.cmpi eq, %c16_i32, %c0_i32 : i32
    %c1_i32 = arith.constant 1 : i32
    %2 = arith.select %1, %c1_i32, %c16_i32 : i32
    %3 = vector.broadcast %2 : i32 to vector<32x256xi32>
    %4 = arith.remsi %0, %3 : vector<32x256xi32>
    %c0_i32_0 = arith.constant 0 : i32
    %5 = vector.broadcast %c0_i32_0 : i32 to vector<32x256xi32>
    %6 = arith.cmpi ne, %4, %5 : vector<32x256xi32>
    %c0_i32_1 = arith.constant 0 : i32
    %7 = vector.broadcast %c0_i32_1 : i32 to vector<32x256xi32>
    %8 = arith.cmpi slt, %4, %7 : vector<32x256xi32>
    %c0_i32_2 = arith.constant 0 : i32
    %9 = arith.cmpi slt, %2, %c0_i32_2 : i32
    %10 = vector.broadcast %9 : i1 to vector<32x256xi1>
    %11 = vector.broadcast %10 : vector<32x256xi1> to vector<32x256xi1>
    %12 = arith.xori %8, %11 : vector<32x256xi1>
    %13 = arith.andi %12, %6 : vector<32x256xi1>
    %14 = vector.broadcast %2 : i32 to vector<32x256xi32>
    %15 = arith.addi %4, %14 : vector<32x256xi32>
    %16 = arith.select %13, %15, %4 : vector<32x256xi1>, vector<32x256xi32>
    %17 = tpu.iota {dimensions = array<i32: 0>} : vector<32x128xi32>
    %c16_i32_3 = arith.constant 16 : i32
    %c0_i32_4 = arith.constant 0 : i32
    %18 = arith.cmpi eq, %c16_i32_3, %c0_i32_4 : i32
    %c1_i32_5 = arith.constant 1 : i32
    %19 = arith.select %18, %c1_i32_5, %c16_i32_3 : i32
    %20 = vector.broadcast %19 : i32 to vector<32x128xi32>
    %21 = arith.remsi %17, %20 : vector<32x128xi32>
    %c0_i32_6 = arith.constant 0 : i32
    %22 = vector.broadcast %c0_i32_6 : i32 to vector<32x128xi32>
    %23 = arith.cmpi ne, %21, %22 : vector<32x128xi32>
    %c0_i32_7 = arith.constant 0 : i32
    %24 = vector.broadcast %c0_i32_7 : i32 to vector<32x128xi32>
    %25 = arith.cmpi slt, %21, %24 : vector<32x128xi32>
    %c0_i32_8 = arith.constant 0 : i32
    %26 = arith.cmpi slt, %19, %c0_i32_8 : i32
    %27 = vector.broadcast %26 : i1 to vector<32x128xi1>
    %28 = vector.broadcast %27 : vector<32x128xi1> to vector<32x128xi1>
    %29 = arith.xori %25, %28 : vector<32x128xi1>
    %30 = arith.andi %29, %23 : vector<32x128xi1>
    %31 = vector.broadcast %19 : i32 to vector<32x128xi32>
    %32 = arith.addi %21, %31 : vector<32x128xi32>
    %33 = arith.select %30, %32, %21 : vector<32x128xi1>, vector<32x128xi32>
    %c0 = arith.constant 0 : index
    %c0_9 = arith.constant 0 : index
    %34 = vector.load %arg3[%c0, %c0_9] : memref<32x16xbf16, #tpu.memory_space<vmem>>, vector<32x16xbf16>
    %c0_10 = arith.constant 0 : index
    %c0_11 = arith.constant 0 : index
    %35 = vector.load %arg1[%c0_10, %c0_11] : memref<16x32xbf16, #tpu.memory_space<vmem>>, vector<16x32xbf16>
    %cst = arith.constant dense<0.000000e+00> : vector<32x32xf32>
    %36 = tpu.matmul %34, %35, %cst {dimension_numbers = #tpu.dot_dimension_numbers<[1], [0], [0], [1], [0, 0, 1, 1], [], []>} : vector<32x16xbf16>, vector<16x32xbf16>, vector<32x32xf32> -> vector<32x32xf32>
    %37 = arith.truncf %36 : vector<32x32xf32> to vector<32x32xbf16>
    %c0_12 = arith.constant 0 : index
    %c0_13 = arith.constant 0 : index
    %38 = vector.load %arg4[%c0_12, %c0_13] : memref<32x768xbf16, #tpu.memory_space<vmem>>, vector<32x768xbf16>
    %cst_14 = arith.constant dense<0.000000e+00> : vector<32x768xf32>
    %39 = tpu.matmul %37, %38, %cst_14 {dimension_numbers = #tpu.dot_dimension_numbers<[1], [0], [0], [1], [0, 0, 1, 1], [], []>} : vector<32x32xbf16>, vector<32x768xbf16>, vector<32x768xf32> -> vector<32x768xf32>
    %c0_15 = arith.constant 0 : index
    %c0_16 = arith.constant 0 : index
    %40 = vector.load %arg2[%c0_15, %c0_16] : memref<32x64xbf16, #tpu.memory_space<vmem>>, vector<32x64xbf16>
    %c0_17 = arith.constant 0 : index
    %c0_18 = arith.constant 0 : index
    %41 = vector.load %arg5[%c0_17, %c0_18] : memref<64x768xbf16, #tpu.memory_space<vmem>>, vector<64x768xbf16>
    %cst_19 = arith.constant dense<0.000000e+00> : vector<32x768xf32>
    %42 = tpu.matmul %40, %41, %cst_19 {dimension_numbers = #tpu.dot_dimension_numbers<[1], [0], [0], [1], [0, 0, 1, 1], [], []>} : vector<32x64xbf16>, vector<64x768xbf16>, vector<32x768xf32> -> vector<32x768xf32>
    %43 = arith.addf %39, %42 : vector<32x768xf32>
    %44 = vector.extract_strided_slice %43 {offsets = [0, 0], sizes = [32, 256], strides = [1, 1]} : vector<32x768xf32> to vector<32x256xf32>
    %45 = vector.extract_strided_slice %43 {offsets = [0, 256], sizes = [32, 256], strides = [1, 1]} : vector<32x768xf32> to vector<32x256xf32>
    %46 = vector.extract_strided_slice %43 {offsets = [0, 512], sizes = [32, 256], strides = [1, 1]} : vector<32x768xf32> to vector<32x256xf32>
    %c0_i32_20 = arith.constant 0 : i32
    %47 = vector.broadcast %c0_i32_20 : i32 to vector<32x256xi32>
    %48 = arith.cmpi ne, %16, %47 : vector<32x256xi32>
    %c1_i32_21 = arith.constant 1 : i32
    %49 = tpu.dynamic_rotate %44 by %c1_i32_21 dim 0 : vector<32x256xf32>, i32 -> vector<32x256xf32>
    %cst_22 = arith.constant 0.000000e+00 : f32
    %50 = vector.broadcast %cst_22 : f32 to vector<32x256xf32>
    %51 = arith.select %48, %49, %50 : vector<32x256xi1>, vector<32x256xf32>
    %52 = arith.addf %45, %51 : vector<32x256xf32>
    %c15_i32 = arith.constant 15 : i32
    %53 = vector.broadcast %c15_i32 : i32 to vector<32x256xi32>
    %54 = arith.cmpi ne, %16, %53 : vector<32x256xi32>
    %c31_i32 = arith.constant 31 : i32
    %55 = tpu.dynamic_rotate %46 by %c31_i32 dim 0 : vector<32x256xf32>, i32 -> vector<32x256xf32>
    %cst_23 = arith.constant 0.000000e+00 : f32
    %56 = vector.broadcast %cst_23 : f32 to vector<32x256xf32>
    %57 = arith.select %54, %55, %56 : vector<32x256xi1>, vector<32x256xf32>
    %58 = arith.addf %52, %57 : vector<32x256xf32>
    %c0_24 = arith.constant 0 : index
    %c0_25 = arith.constant 0 : index
    %59 = vector.load %arg6[%c0_24, %c0_25] : memref<1x256xf32, #tpu.memory_space<vmem>>, vector<1x256xf32>
    %60 = vector.broadcast %59 : vector<1x256xf32> to vector<32x256xf32>
    %61 = arith.mulf %58, %60 : vector<32x256xf32>
    %c0_26 = arith.constant 0 : index
    %c0_27 = arith.constant 0 : index
    %62 = vector.load %arg7[%c0_26, %c0_27] : memref<1x256xf32, #tpu.memory_space<vmem>>, vector<1x256xf32>
    %63 = vector.broadcast %62 : vector<1x256xf32> to vector<32x256xf32>
    %64 = arith.addf %61, %63 : vector<32x256xf32>
    %cst_28 = arith.constant 0.000000e+00 : f32
    %65 = vector.broadcast %cst_28 : f32 to vector<32x256xf32>
    %66 = arith.maximumf %64, %65 : vector<32x256xf32>
    %67 = arith.truncf %66 : vector<32x256xf32> to vector<32x256xbf16>
    %c0_29 = arith.constant 0 : index
    %c0_30 = arith.constant 0 : index
    %68 = vector.load %arg8[%c0_29, %c0_30] : memref<256x384xbf16, #tpu.memory_space<vmem>>, vector<256x384xbf16>
    %cst_31 = arith.constant dense<0.000000e+00> : vector<32x384xf32>
    %69 = tpu.matmul %67, %68, %cst_31 {dimension_numbers = #tpu.dot_dimension_numbers<[1], [0], [0], [1], [0, 0, 1, 1], [], []>} : vector<32x256xbf16>, vector<256x384xbf16>, vector<32x384xf32> -> vector<32x384xf32>
    %70 = vector.extract_strided_slice %69 {offsets = [0, 0], sizes = [32, 128], strides = [1, 1]} : vector<32x384xf32> to vector<32x128xf32>
    %71 = vector.extract_strided_slice %69 {offsets = [0, 128], sizes = [32, 128], strides = [1, 1]} : vector<32x384xf32> to vector<32x128xf32>
    %72 = vector.extract_strided_slice %69 {offsets = [0, 256], sizes = [32, 128], strides = [1, 1]} : vector<32x384xf32> to vector<32x128xf32>
    %c0_i32_32 = arith.constant 0 : i32
    %73 = vector.broadcast %c0_i32_32 : i32 to vector<32x128xi32>
    %74 = arith.cmpi ne, %33, %73 : vector<32x128xi32>
    %c1_i32_33 = arith.constant 1 : i32
    %75 = tpu.dynamic_rotate %70 by %c1_i32_33 dim 0 : vector<32x128xf32>, i32 -> vector<32x128xf32>
    %cst_34 = arith.constant 0.000000e+00 : f32
    %76 = vector.broadcast %cst_34 : f32 to vector<32x128xf32>
    %77 = arith.select %74, %75, %76 : vector<32x128xi1>, vector<32x128xf32>
    %78 = arith.addf %71, %77 : vector<32x128xf32>
    %c15_i32_35 = arith.constant 15 : i32
    %79 = vector.broadcast %c15_i32_35 : i32 to vector<32x128xi32>
    %80 = arith.cmpi ne, %33, %79 : vector<32x128xi32>
    %c31_i32_36 = arith.constant 31 : i32
    %81 = tpu.dynamic_rotate %72 by %c31_i32_36 dim 0 : vector<32x128xf32>, i32 -> vector<32x128xf32>
    %cst_37 = arith.constant 0.000000e+00 : f32
    %82 = vector.broadcast %cst_37 : f32 to vector<32x128xf32>
    %83 = arith.select %80, %81, %82 : vector<32x128xi1>, vector<32x128xf32>
    %84 = arith.addf %78, %83 : vector<32x128xf32>
    %c0_38 = arith.constant 0 : index
    %c0_39 = arith.constant 0 : index
    %85 = vector.load %arg9[%c0_38, %c0_39] : memref<1x128xf32, #tpu.memory_space<vmem>>, vector<1x128xf32>
    %86 = vector.broadcast %85 : vector<1x128xf32> to vector<32x128xf32>
    %87 = arith.addf %84, %86 : vector<32x128xf32>
    %c0_40 = arith.constant 0 : index
    %c0_41 = arith.constant 0 : index
    %88 = vector.load %arg10[%c0_40, %c0_41] : memref<32x128xf32, #tpu.memory_space<vmem>>, vector<32x128xf32>
    tpu.vector_store %arg10[%c0_40, %c0_41], %87 {strides = array<i32>} : memref<32x128xf32, #tpu.memory_space<vmem>>, vector<32x128xf32>,
    return
  }
  func.func @transform_0(%arg0: i32) -> (i32, i32) {
    %c0_i32 = arith.constant 0 : i32
    %c0_i32_0 = arith.constant 0 : i32
    return %arg0, %c0_i32 : i32, i32
  }
  func.func @transform_1(%arg0: i32) -> (i32, i32) {
    %c0_i32 = arith.constant 0 : i32
    %c0_i32_0 = arith.constant 0 : i32
    return %arg0, %c0_i32 : i32, i32
  }
  func.func @transform_2(%arg0: i32) -> (i32, i32) {
    %c0_i32 = arith.constant 0 : i32
    %c0_i32_0 = arith.constant 0 : i32
    %c0_i32_1 = arith.constant 0 : i32
    return %c0_i32, %c0_i32_0 : i32, i32
  }
  func.func @transform_3(%arg0: i32) -> (i32, i32) {
    %c0_i32 = arith.constant 0 : i32
    %c0_i32_0 = arith.constant 0 : i32
    %c0_i32_1 = arith.constant 0 : i32
    return %c0_i32, %c0_i32_0 : i32, i32
  }
  func.func @transform_4(%arg0: i32) -> (i32, i32) {
    %c0_i32 = arith.constant 0 : i32
    %c0_i32_0 = arith.constant 0 : i32
    %c0_i32_1 = arith.constant 0 : i32
    return %c0_i32, %c0_i32_0 : i32, i32
  }
  func.func @transform_5(%arg0: i32) -> (i32, i32) {
    %c0_i32 = arith.constant 0 : i32
    %c0_i32_0 = arith.constant 0 : i32
    %c0_i32_1 = arith.constant 0 : i32
    return %c0_i32, %c0_i32_0 : i32, i32
  }
  func.func @transform_6(%arg0: i32) -> (i32, i32) {
    %c0_i32 = arith.constant 0 : i32
    %c0_i32_0 = arith.constant 0 : i32
    %c0_i32_1 = arith.constant 0 : i32
    return %c0_i32, %c0_i32_0 : i32, i32
  }
  func.func @transform_7(%arg0: i32) -> (i32, i32) {
    %c0_i32 = arith.constant 0 : i32
    %c0_i32_0 = arith.constant 0 : i32
    %c0_i32_1 = arith.constant 0 : i32
    return %c0_i32, %c0_i32_0 : i32, i32
  }
  func.func @transform_8(%arg0: i32) -> (i32, i32) {
    %c0_i32 = arith.constant 0 : i32
    %c0_i32_0 = arith.constant 0 : i32
    %c0_i32_1 = arith.constant 0 : i32
    return %c0_i32, %c0_i32_0 : i32, i32
  }
  func.func @transform_9(%arg0: i32) -> (i32, i32) {
    %c0_i32 = arith.constant 0 : i32
    %c0_i32_0 = arith.constant 0 : i32
    return %arg0, %c0_i32 : i32, i32
  }
}

</mosaic_0001>

<llo_original>
// kernel: fwd.1
$region0: #{fwd.1}
  #allocation0 [shape = 'u32[]', space=smem, size = 0x4, offset = 0x4, fixed_abs, tag = 'smem constant byte address 0x4 - core index']
  #allocation1 [shape = 'u32[144,128]{1,0:T(1,128)}', space=vmem, size = 0x12000, scoped, tag = 'internal scratch']
  %s0 = inlined_call_operand.vmem [shape: bf16[16,32], index: 0, kind: input, shape index: {}]
  %s1 = inlined_call_operand.vmem [shape: bf16[32,64], index: 1, kind: input, shape index: {}]
  %s2 = inlined_call_operand.vmem [shape: bf16[32,16], index: 2, kind: input, shape index: {}]
  %s3 = inlined_call_operand.vmem [shape: bf16[32,768], index: 3, kind: input, shape index: {}]
  %s4 = inlined_call_operand.vmem [shape: bf16[64,768], index: 4, kind: input, shape index: {}]
  %s5 = inlined_call_operand.vmem [shape: f32[1,256], index: 5, kind: input, shape index: {}]
  %s6 = inlined_call_operand.vmem [shape: f32[1,256], index: 6, kind: input, shape index: {}]
  %s7 = inlined_call_operand.vmem [shape: bf16[256,384], index: 7, kind: input, shape index: {}]
  %s8 = inlined_call_operand.vmem [shape: f32[1,128], index: 8, kind: input, shape index: {}]
  %s9 = inlined_call_operand.vmem [shape: f32[32,128], index: 9, kind: output, shape index: {}]
  %s10 = sld [smem:[#allocation0]]
  $region46: #{fwd.1} parent=0
    _
  %s12 = ssub.s32 1, %s10
  %s13 = scalar_select 0, %s12, %s10
  // Predicated region
  $region2: #{fwd.1} parent=0 // pred_check
    _
  $region3: #{fwd.1} parent=0 // pred_check_branch
    %15 = sbr.rel (0) target = $region5
  $region4: #{fwd.1} parent=0 // pred_region
    _
  $region5: #{fwd.1} parent=0 // pred_fallthru
    _
  // Predicated region
  $region6: #{fwd.1} parent=0 // pred_check
    _
  $region7: #{fwd.1} parent=0 // pred_check_branch
    %17 = sbr.rel (0) target = $region9
  $region8: #{fwd.1} parent=0 // pred_region
    _
  $region9: #{fwd.1} parent=0 // pred_fallthru
    _
  // Predicated region
  $region10: #{fwd.1} parent=0 // pred_check
    _
  $region11: #{fwd.1} parent=0 // pred_check_branch
    %19 = sbr.rel (0) target = $region13
  $region12: #{fwd.1} parent=0 // pred_region
    _
  $region13: #{fwd.1} parent=0 // pred_fallthru
    _
  // Predicated region
  $region14: #{fwd.1} parent=0 // pred_check
    _
  $region15: #{fwd.1} parent=0 // pred_check_branch
    %21 = sbr.rel (0) target = $region17
  $region16: #{fwd.1} parent=0 // pred_region
    _
  $region17: #{fwd.1} parent=0 // pred_fallthru
    _
  // Predicated region
  $region18: #{fwd.1} parent=0 // pred_check
    _
  $region19: #{fwd.1} parent=0 // pred_check_branch
    %23 = sbr.rel (0) target = $region21
  $region20: #{fwd.1} parent=0 // pred_region
    _
  $region21: #{fwd.1} parent=0 // pred_fallthru
    _
  // Predicated region
  $region22: #{fwd.1} parent=0 // pred_check
    _
  $region23: #{fwd.1} parent=0 // pred_check_branch
    %25 = sbr.rel (0) target = $region25
  $region24: #{fwd.1} parent=0 // pred_region
    _
  $region25: #{fwd.1} parent=0 // pred_fallthru
    _
  // Predicated region
  $region26: #{fwd.1} parent=0 // pred_check
    _
  $region27: #{fwd.1} parent=0 // pred_check_branch
    %27 = sbr.rel (0) target = $region29
  $region28: #{fwd.1} parent=0 // pred_region
    _
  $region29: #{fwd.1} parent=0 // pred_fallthru
    _
  // Predicated region
  $region30: #{fwd.1} parent=0 // pred_check
    _
  $region31: #{fwd.1} parent=0 // pred_check_branch
    %29 = sbr.rel (0) target = $region33
  $region32: #{fwd.1} parent=0 // pred_region
    _
  $region33: #{fwd.1} parent=0 // pred_fallthru
    _
  // Predicated region
  $region34: #{fwd.1} parent=0 // pred_check
    _
  $region35: #{fwd.1} parent=0 // pred_check_branch
    %31 = sbr.rel (0) target = $region37
  $region36: #{fwd.1} parent=0 // pred_region
    _
  $region37: #{fwd.1} parent=0 // pred_fallthru
    _
  %v33 = vlaneseq
  %v34 = vshrl.u32 %v33, 7
  %v35 = vadd.s32 %v34, 8
  %v36 = vadd.s32 %v34, 16
  %v37 = vadd.s32 %v34, 24
  %vm38 = vcmp.lt.s32.totalorder %v34, 0
  %v39 = vsub.s32 0, %v34
  %v40 = vsel %vm38, %v39, %v34
  %v41 = vshrl.u32 %v40, 4
  %v42 = vand.u32 %v40, 15
  %v43 = vsub.s32 0, %v42
  %v44 = vsel %vm38, %v43, %v42
  %vm45 = vcmp.lt.s32.totalorder %v35, 0
  %v46 = vsub.s32 0, %v35
  %v47 = vsel %vm45, %v46, %v35
  %v48 = vshrl.u32 %v47, 4
  %v49 = vand.u32 %v47, 15
  %v50 = vsub.s32 0, %v49
  %v51 = vsel %vm45, %v50, %v49
  %vm52 = vcmp.lt.s32.totalorder %v36, 0
  %v53 = vsub.s32 0, %v36
  %v54 = vsel %vm52, %v53, %v36
  %v55 = vshrl.u32 %v54, 4
  %v56 = vand.u32 %v54, 15
  %v57 = vsub.s32 0, %v56
  %v58 = vsel %vm52, %v57, %v56
  %vm59 = vcmp.lt.s32.totalorder %v37, 0
  %v60 = vsub.s32 0, %v37
  %v61 = vsel %vm59, %v60, %v37
  %v62 = vshrl.u32 %v61, 4
  %v63 = vand.u32 %v61, 15
  %v64 = vsub.s32 0, %v63
  %v65 = vsel %vm59, %v64, %v63
  %vm66 = vcmp.ne.s32.totalorder %v44, 0
  %vm67 = vcmp.ne.s32.totalorder %v51, 0
  %vm68 = vcmp.ne.s32.totalorder %v58, 0
  %vm69 = vcmp.ne.s32.totalorder %v65, 0
  %vm70 = vcmp.lt.s32.totalorder %v44, 0
  %vm71 = vcmp.lt.s32.totalorder %v51, 0
  %vm72 = vcmp.lt.s32.totalorder %v58, 0
  %vm73 = vcmp.lt.s32.totalorder %v65, 0
  %vm74 = vmand %vm70, %vm66
  %vm75 = vmand %vm71, %vm67
  %vm76 = vmand %vm72, %vm68
  %vm77 = vmand %vm73, %vm69
  %v78 = vadd.s32 %v44, 16
  %v79 = vadd.s32 %v51, 16
  %v80 = vadd.s32 %v58, 16
  %v81 = vadd.s32 %v65, 16
  %v82 = vsel %vm74, %v78, %v44
  %v83 = vsel %vm75, %v79, %v51
  %v84 = vsel %vm76, %v80, %v58
  %v85 = vsel %vm77, %v81, %v65
  %v86 = vld [vmem:[%s2] sm:$0xf]
  %v87 = vld [vmem:[%s2 + $0x4] sm:$0xf]
  %v88 = vld [vmem:[%s2 + $0x8] sm:$0xf]
  %v89 = vld [vmem:[%s2 + $0xc] sm:$0xf]
  %v90 = vld [vmem:[%s0] sm:$0xf]
  %v91 = vld [vmem:[%s0 + $0x4] sm:$0xf]
  %v96 = vunpack.c.l.b16 %v86
  %v97 = vunpack.c.l.b16 %v87
  %v98 = vunpack.c.l.b16 %v88
  %v99 = vunpack.c.l.b16 %v89
  %v100 = vpack.c.b16 %v97, %v96
  %v101 = vpack.c.b16 %v99, %v98
  %v104 = vunpack.c.l.b16 %v90
  %v105 = vunpack.c.l.b16 %v91
  %v106 = vpack.c.b16 %v105, %v104
  %vm108 = vcmask 130048
  %v110 = vsel %vm108, %v100, 0
  %v113 = vsel %vm108, %v101, 0
  %115 = vmatprep.subr.bf16.mxu0 0
  %116 = vmatpush1.bf16.msra.mxu0 0
  %117 = vmatprep.subr.bf16.mxu0 0
  %118 = vmatpush1.bf16.msra.mxu0 0
  %119 = vmatprep.subr.bf16.mxu0 0
  %120 = vmatpush1.bf16.msra.mxu0 0
  %121 = vmatprep.subr.bf16.mxu0 0
  %122 = vmatpush1.bf16.msra.mxu0 0
  %123 = vmatprep.subr.bf16.mxu0 0
  %124 = vmatpush1.bf16.msra.mxu0 0
  %125 = vmatprep.subr.bf16.mxu0 0
  %126 = vmatpush1.bf16.msra.mxu0 0
  %127 = vmatprep.subr.bf16.mxu0 0
  %128 = vmatpush1.bf16.msra.mxu0 0
  %129 = vmatprep.subr.bf16.mxu0 0
  %130 = vmatpush1.bf16.msra.mxu0 %v106
  %131 = vmatprep.subr.bf16.mxu0 0
  %132 = vmatpush2.bf16.msra.mxu0 0
  %133 = vmatprep.subr.bf16.mxu0 0
  %134 = vmatpush2.bf16.msra.mxu0 0
  %135 = vmatprep.subr.bf16.mxu0 0
  %136 = vmatpush2.bf16.msra.mxu0 0
  %137 = vmatprep.subr.bf16.mxu0 0
  %138 = vmatpush2.bf16.msra.mxu0 0
  %139 = vmatprep.subr.bf16.mxu0 0
  %140 = vmatpush2.bf16.msra.mxu0 0
  %141 = vmatprep.subr.bf16.mxu0 0
  %142 = vmatpush2.bf16.msra.mxu0 0
  %143 = vmatprep.subr.bf16.mxu0 0
  %144 = vmatpush2.bf16.msra.mxu0 0
  %145 = vmatprep.subr.bf16.mxu0 0
  %146 = vmatpush2.bf16.msra.mxu0 0
  %147 = vmatprep.mubr.bf16.mxu0 0
  %148 = vmatmul.mubr.bf16.gmra.mxu0 %v110
  %v149 = vpop.f32.mrf.mxu0
  %v150 = vadd.f32 0.0, %v149
  %v151 = vpop.f32.mrf.mxu0
  %v152 = vpop.f32.mrf.mxu0
  %v153 = vadd.f32 0.0, %v152
  %v154 = vpop.f32.mrf.mxu0
  %155 = vmatprep.mubr.bf16.mxu0 0
  %156 = vmatmul.mubr.bf16.gmra.mxu0 %v113
  %v157 = vpop.f32.mrf.mxu0
  %v158 = vadd.f32 0.0, %v157
  %v159 = vpop.f32.mrf.mxu0
  %v160 = vpop.f32.mrf.mxu0
  %v161 = vadd.f32 0.0, %v160
  %v162 = vpop.f32.mrf.mxu0
  %163 = vdwg.mxu0
  %v164 = vpack.c.bf16 %v153, %v150
  %v165 = vpack.c.bf16 %v161, %v158
  %v166 = vld [vmem:[%s3] sm:$0xff]
  %v167 = vld [vmem:[%s3 + $0x8] sm:$0xff]
  %v168 = vld [vmem:[%s3 + $0x10] sm:$0xff]
  %v169 = vld [vmem:[%s3 + $0x18] sm:$0xff]
  %v170 = vld [vmem:[%s3 + $0x20] sm:$0xff]
  %v171 = vld [vmem:[%s3 + $0x28] sm:$0xff]
  %v172 = vld [vmem:[%s3 + $0x30] sm:$0xff]
  %v173 = vld [vmem:[%s3 + $0x38] sm:$0xff]
  %v174 = vld [vmem:[%s3 + $0x40] sm:$0xff]
  %v175 = vld [vmem:[%s3 + $0x48] sm:$0xff]
  %v176 = vld [vmem:[%s3 + $0x50] sm:$0xff]
  %v177 = vld [vmem:[%s3 + $0x58] sm:$0xff]
  %v178 = vld [vmem:[%s1] sm:$0xf]
  %v179 = vld [vmem:[%s1 + $0x4] sm:$0xf]
  %v180 = vld [vmem:[%s1 + $0x8] sm:$0xf]
  %v181 = vld [vmem:[%s1 + $0xc] sm:$0xf]
  %v182 = vld [vmem:[%s4] sm:$0xff]
  %v183 = vld [vmem:[%s4 + $0x8] sm:$0xff]
  %v184 = vld [vmem:[%s4 + $0x10] sm:$0xff]
  %v185 = vld [vmem:[%s4 + $0x18] sm:$0xff]
  %v186 = vld [vmem:[%s4 + $0x20] sm:$0xff]
  %v187 = vld [vmem:[%s4 + $0x28] sm:$0xff]
  %v188 = vld [vmem:[%s4 + $0x30] sm:$0xff]
  %v189 = vld [vmem:[%s4 + $0x38] sm:$0xff]
  %v190 = vld [vmem:[%s4 + $0x40] sm:$0xff]
  %v191 = vld [vmem:[%s4 + $0x48] sm:$0xff]
  %v192 = vld [vmem:[%s4 + $0x50] sm:$0xff]
  %v193 = vld [vmem:[%s4 + $0x58] sm:$0xff]
  %v194 = vld [vmem:[%s4 + $0x60] sm:$0xff]
  %v195 = vld [vmem:[%s4 + $0x68] sm:$0xff]
  %v196 = vld [vmem:[%s4 + $0x70] sm:$0xff]
  %v197 = vld [vmem:[%s4 + $0x78] sm:$0xff]
  %v198 = vld [vmem:[%s4 + $0x80] sm:$0xff]
  %v199 = vld [vmem:[%s4 + $0x88] sm:$0xff]
  %v200 = vld [vmem:[%s4 + $0x90] sm:$0xff]
  %v201 = vld [vmem:[%s4 + $0x98] sm:$0xff]
  %v202 = vld [vmem:[%s4 + $0xa0] sm:$0xff]
  %v203 = vld [vmem:[%s4 + $0xa8] sm:$0xff]
  %v204 = vld [vmem:[%s4 + $0xb0] sm:$0xff]
  %v205 = vld [vmem:[%s4 + $0xb8] sm:$0xff]
  %v210 = vunpack.c.l.b16 %v178
  %v211 = vunpack.c.l.b16 %v179
  %v212 = vunpack.c.l.b16 %v180
  %v213 = vunpack.c.l.b16 %v181
  %v214 = vpack.c.b16 %v211, %v210
  %v215 = vpack.c.b16 %v213, %v212
  %v240 = vunpack.c.l.b16 %v182
  %v241 = vunpack.c.h.b16 %v182
  %v242 = vunpack.c.l.b16 %v183
  %v243 = vunpack.c.h.b16 %v183
  %v244 = vunpack.c.l.b16 %v184
  %v245 = vunpack.c.h.b16 %v184
  %v246 = vunpack.c.l.b16 %v185
  %v247 = vunpack.c.h.b16 %v185
  %v248 = vunpack.c.l.b16 %v186
  %v249 = vunpack.c.h.b16 %v186
  %v250 = vunpack.c.l.b16 %v187
  %v251 = vunpack.c.h.b16 %v187
  %v252 = vunpack.c.l.b16 %v188
  %v253 = vunpack.c.h.b16 %v188
  %v254 = vunpack.c.l.b16 %v189
  %v255 = vunpack.c.h.b16 %v189
  %v256 = vunpack.c.l.b16 %v190
  %v257 = vunpack.c.h.b16 %v190
  %v258 = vunpack.c.l.b16 %v191
  %v259 = vunpack.c.h.b16 %v191
  %v260 = vunpack.c.l.b16 %v192
  %v261 = vunpack.c.h.b16 %v192
  %v262 = vunpack.c.l.b16 %v193
  %v263 = vunpack.c.h.b16 %v193
  %v264 = vunpack.c.l.b16 %v194
  %v265 = vunpack.c.h.b16 %v194
  %v266 = vunpack.c.l.b16 %v195
  %v267 = vunpack.c.h.b16 %v195
  %v268 = vunpack.c.l.b16 %v196
  %v269 = vunpack.c.h.b16 %v196
  %v270 = vunpack.c.l.b16 %v197
  %v271 = vunpack.c.h.b16 %v197
  %v272 = vunpack.c.l.b16 %v198
  %v273 = vunpack.c.h.b16 %v198
  %v274 = vunpack.c.l.b16 %v199
  %v275 = vunpack.c.h.b16 %v199
  %v276 = vunpack.c.l.b16 %v200
  %v277 = vunpack.c.h.b16 %v200
  %v278 = vunpack.c.l.b16 %v201
  %v279 = vunpack.c.h.b16 %v201
  %v280 = vunpack.c.l.b16 %v202
  %v281 = vunpack.c.h.b16 %v202
  %v282 = vunpack.c.l.b16 %v203
  %v283 = vunpack.c.h.b16 %v203
  %v284 = vunpack.c.l.b16 %v204
  %v285 = vunpack.c.h.b16 %v204
  %v286 = vunpack.c.l.b16 %v205
  %v287 = vunpack.c.h.b16 %v205
  %v288 = vpack.c.b16 %v246, %v240
  %v289 = vpack.c.b16 %v247, %v241
  %v290 = vpack.c.b16 %v248, %v242
  %v291 = vpack.c.b16 %v249, %v243
  %v292 = vpack.c.b16 %v250, %v244
  %v293 = vpack.c.b16 %v251, %v245
  %v294 = vpack.c.b16 %v258, %v252
  %v295 = vpack.c.b16 %v259, %v253
  %v296 = vpack.c.b16 %v260, %v254
  %v297 = vpack.c.b16 %v261, %v255
  %v298 = vpack.c.b16 %v262, %v256
  %v299 = vpack.c.b16 %v263, %v257
  %v300 = vpack.c.b16 %v270, %v264
  %v301 = vpack.c.b16 %v271, %v265
  %v302 = vpack.c.b16 %v272, %v266
  %v303 = vpack.c.b16 %v273, %v267
  %v304 = vpack.c.b16 %v274, %v268
  %v305 = vpack.c.b16 %v275, %v269
  %v306 = vpack.c.b16 %v282, %v276
  %v307 = vpack.c.b16 %v283, %v277
  %v308 = vpack.c.b16 %v284, %v278
  %v309 = vpack.c.b16 %v285, %v279
  %v310 = vpack.c.b16 %v286, %v280
  %v311 = vpack.c.b16 %v287, %v281
  %vm336 = vcmask 523264
  %v338 = vsel %vm336, %v214, 0
  %v341 = vsel %vm336, %v215, 0
  %343 = vmatprep.subr.bf16.mxu0 0
  %344 = vmatpush1.bf16.msra.mxu0 0
  %345 = vmatprep.subr.bf16.mxu0 0
  %346 = vmatpush1.bf16.msra.mxu0 0
  %347 = vmatprep.subr.bf16.mxu0 0
  %348 = vmatpush1.bf16.msra.mxu0 0
  %349 = vmatprep.subr.bf16.mxu0 0
  %350 = vmatpush1.bf16.msra.mxu0 0
  %351 = vmatprep.subr.bf16.mxu0 %v307
  %352 = vmatpush1.bf16.msra.mxu0 %v306
  %353 = vmatprep.subr.bf16.mxu0 %v301
  %354 = vmatpush1.bf16.msra.mxu0 %v300
  %355 = vmatprep.subr.bf16.mxu0 %v295
  %356 = vmatpush1.bf16.msra.mxu0 %v294
  %357 = vmatprep.subr.bf16.mxu0 %v289
  %358 = vmatpush1.bf16.msra.mxu0 %v288
  %359 = vmatprep.subr.bf16.mxu0 0
  %360 = vmatpush2.bf16.msra.mxu0 0
  %361 = vmatprep.subr.bf16.mxu0 0
  %362 = vmatpush2.bf16.msra.mxu0 0
  %363 = vmatprep.subr.bf16.mxu0 0
  %364 = vmatpush2.bf16.msra.mxu0 0
  %365 = vmatprep.subr.bf16.mxu0 0
  %366 = vmatpush2.bf16.msra.mxu0 0
  %367 = vmatprep.subr.bf16.mxu0 0
  %368 = vmatpush2.bf16.msra.mxu0 0
  %369 = vmatprep.subr.bf16.mxu0 0
  %370 = vmatpush2.bf16.msra.mxu0 0
  %371 = vmatprep.subr.bf16.mxu0 0
  %372 = vmatpush2.bf16.msra.mxu0 0
  %373 = vmatprep.subr.bf16.mxu0 0
  %374 = vmatpush2.bf16.msra.mxu0 0
  %375 = vmatprep.mubr.bf16.mxu0 0
  %376 = vmatmul.mubr.bf16.gmra.mxu0 %v338
  %v377 = vpop.f32.mrf.mxu0
  %v378 = vadd.f32 0.0, %v377
  %v379 = vpop.f32.mrf.mxu0
  %v380 = vadd.f32 0.0, %v379
  %v381 = vpop.f32.mrf.mxu0
  %v382 = vadd.f32 0.0, %v381
  %v383 = vpop.f32.mrf.mxu0
  %v384 = vadd.f32 0.0, %v383
  %385 = vmatprep.mubr.bf16.mxu0 0
  %386 = vmatmul.mubr.bf16.gmra.mxu0 %v341
  %v387 = vpop.f32.mrf.mxu0
  %v388 = vadd.f32 0.0, %v387
  %v389 = vpop.f32.mrf.mxu0
  %v390 = vadd.f32 0.0, %v389
  %v391 = vpop.f32.mrf.mxu0
  %v392 = vadd.f32 0.0, %v391
  %v393 = vpop.f32.mrf.mxu0
  %v394 = vadd.f32 0.0, %v393
  %395 = vdwg.mxu0
  %396 = vmatprep.subr.bf16.mxu0 0
  %397 = vmatpush1.bf16.msra.mxu0 0
  %398 = vmatprep.subr.bf16.mxu0 0
  %399 = vmatpush1.bf16.msra.mxu0 0
  %400 = vmatprep.subr.bf16.mxu0 0
  %401 = vmatpush1.bf16.msra.mxu0 0
  %402 = vmatprep.subr.bf16.mxu0 0
  %403 = vmatpush1.bf16.msra.mxu0 0
  %404 = vmatprep.subr.bf16.mxu0 %v309
  %405 = vmatpush1.bf16.msra.mxu0 %v308
  %406 = vmatprep.subr.bf16.mxu0 %v303
  %407 = vmatpush1.bf16.msra.mxu0 %v302
  %408 = vmatprep.subr.bf16.mxu0 %v297
  %409 = vmatpush1.bf16.msra.mxu0 %v296
  %410 = vmatprep.subr.bf16.mxu0 %v291
  %411 = vmatpush1.bf16.msra.mxu0 %v290
  %412 = vmatprep.subr.bf16.mxu0 0
  %413 = vmatpush2.bf16.msra.mxu0 0
  %414 = vmatprep.subr.bf16.mxu0 0
  %415 = vmatpush2.bf16.msra.mxu0 0
  %416 = vmatprep.subr.bf16.mxu0 0
  %417 = vmatpush2.bf16.msra.mxu0 0
  %418 = vmatprep.subr.bf16.mxu0 0
  %419 = vmatpush2.bf16.msra.mxu0 0
  %420 = vmatprep.subr.bf16.mxu0 0
  %421 = vmatpush2.bf16.msra.mxu0 0
  %422 = vmatprep.subr.bf16.mxu0 0
  %423 = vmatpush2.bf16.msra.mxu0 0
  %424 = vmatprep.subr.bf16.mxu0 0
  %425 = vmatpush2.bf16.msra.mxu0 0
  %426 = vmatprep.subr.bf16.mxu0 0
  %427 = vmatpush2.bf16.msra.mxu0 0
  %428 = vmatprep.mubr.bf16.mxu0 0
  %429 = vmatmul.mubr.bf16.gmra.mxu0 %v338
  %v430 = vpop.f32.mrf.mxu0
  %v431 = vadd.f32 0.0, %v430
  %v432 = vpop.f32.mrf.mxu0
  %v433 = vadd.f32 0.0, %v432
  %v434 = vpop.f32.mrf.mxu0
  %v435 = vadd.f32 0.0, %v434
  %v436 = vpop.f32.mrf.mxu0
  %v437 = vadd.f32 0.0, %v436
  %438 = vmatprep.mubr.bf16.mxu0 0
  %439 = vmatmul.mubr.bf16.gmra.mxu0 %v341
  %v440 = vpop.f32.mrf.mxu0
  %v441 = vadd.f32 0.0, %v440
  %v442 = vpop.f32.mrf.mxu0
  %v443 = vadd.f32 0.0, %v442
  %v444 = vpop.f32.mrf.mxu0
  %v445 = vadd.f32 0.0, %v444
  %v446 = vpop.f32.mrf.mxu0
  %v447 = vadd.f32 0.0, %v446
  %448 = vdwg.mxu0
  %449 = vmatprep.subr.bf16.mxu0 0
  %450 = vmatpush1.bf16.msra.mxu0 0
  %451 = vmatprep.subr.bf16.mxu0 0
  %452 = vmatpush1.bf16.msra.mxu0 0
  %453 = vmatprep.subr.bf16.mxu0 0
  %454 = vmatpush1.bf16.msra.mxu0 0
  %455 = vmatprep.subr.bf16.mxu0 0
  %456 = vmatpush1.bf16.msra.mxu0 0
  %457 = vmatprep.subr.bf16.mxu0 %v311
  %458 = vmatpush1.bf16.msra.mxu0 %v310
  %459 = vmatprep.subr.bf16.mxu0 %v305
  %460 = vmatpush1.bf16.msra.mxu0 %v304
  %461 = vmatprep.subr.bf16.mxu0 %v299
  %462 = vmatpush1.bf16.msra.mxu0 %v298
  %463 = vmatprep.subr.bf16.mxu0 %v293
  %464 = vmatpush1.bf16.msra.mxu0 %v292
  %465 = vmatprep.subr.bf16.mxu0 0
  %466 = vmatpush2.bf16.msra.mxu0 0
  %467 = vmatprep.subr.bf16.mxu0 0
  %468 = vmatpush2.bf16.msra.mxu0 0
  %469 = vmatprep.subr.bf16.mxu0 0
  %470 = vmatpush2.bf16.msra.mxu0 0
  %471 = vmatprep.subr.bf16.mxu0 0
  %472 = vmatpush2.bf16.msra.mxu0 0
  %473 = vmatprep.subr.bf16.mxu0 0
  %474 = vmatpush2.bf16.msra.mxu0 0
  %475 = vmatprep.subr.bf16.mxu0 0
  %476 = vmatpush2.bf16.msra.mxu0 0
  %477 = vmatprep.subr.bf16.mxu0 0
  %478 = vmatpush2.bf16.msra.mxu0 0
  %479 = vmatprep.subr.bf16.mxu0 0
  %480 = vmatpush2.bf16.msra.mxu0 0
  %481 = vmatprep.mubr.bf16.mxu0 0
  %482 = vmatmul.mubr.bf16.gmra.mxu0 %v338
  %v483 = vpop.f32.mrf.mxu0
  %v484 = vadd.f32 0.0, %v483
  %v485 = vpop.f32.mrf.mxu0
  %v486 = vadd.f32 0.0, %v485
  %v487 = vpop.f32.mrf.mxu0
  %v488 = vadd.f32 0.0, %v487
  %v489 = vpop.f32.mrf.mxu0
  %v490 = vadd.f32 0.0, %v489
  %491 = vmatprep.mubr.bf16.mxu0 0
  %492 = vmatmul.mubr.bf16.gmra.mxu0 %v341
  %v493 = vpop.f32.mrf.mxu0
  %v494 = vadd.f32 0.0, %v493
  %v495 = vpop.f32.mrf.mxu0
  %v496 = vadd.f32 0.0, %v495
  %v497 = vpop.f32.mrf.mxu0
  %v498 = vadd.f32 0.0, %v497
  %v499 = vpop.f32.mrf.mxu0
  %v500 = vadd.f32 0.0, %v499
  %501 = vdwg.mxu0
  %v514 = vunpack.c.l.b16 %v166
  %v515 = vunpack.c.h.b16 %v166
  %v516 = vunpack.c.l.b16 %v167
  %v517 = vunpack.c.h.b16 %v167
  %v518 = vunpack.c.l.b16 %v168
  %v519 = vunpack.c.h.b16 %v168
  %v520 = vunpack.c.l.b16 %v169
  %v521 = vunpack.c.h.b16 %v169
  %v522 = vunpack.c.l.b16 %v170
  %v523 = vunpack.c.h.b16 %v170
  %v524 = vunpack.c.l.b16 %v171
  %v525 = vunpack.c.h.b16 %v171
  %v526 = vunpack.c.l.b16 %v172
  %v527 = vunpack.c.h.b16 %v172
  %v528 = vunpack.c.l.b16 %v173
  %v529 = vunpack.c.h.b16 %v173
  %v530 = vunpack.c.l.b16 %v174
  %v531 = vunpack.c.h.b16 %v174
  %v532 = vunpack.c.l.b16 %v175
  %v533 = vunpack.c.h.b16 %v175
  %v534 = vunpack.c.l.b16 %v176
  %v535 = vunpack.c.h.b16 %v176
  %v536 = vunpack.c.l.b16 %v177
  %v537 = vunpack.c.h.b16 %v177
  %v538 = vpack.c.b16 %v520, %v514
  %v539 = vpack.c.b16 %v521, %v515
  %v540 = vpack.c.b16 %v522, %v516
  %v541 = vpack.c.b16 %v523, %v517
  %v542 = vpack.c.b16 %v524, %v518
  %v543 = vpack.c.b16 %v525, %v519
  %v544 = vpack.c.b16 %v532, %v526
  %v545 = vpack.c.b16 %v533, %v527
  %v546 = vpack.c.b16 %v534, %v528
  %v547 = vpack.c.b16 %v535, %v529
  %v548 = vpack.c.b16 %v536, %v530
  %v549 = vpack.c.b16 %v537, %v531
  %vm562 = vcmask 261120
  %v564 = vsel %vm562, %v164, 0
  %v567 = vsel %vm562, %v165, 0
  %569 = vmatprep.subr.bf16.mxu0 0
  %570 = vmatpush1.bf16.msra.mxu0 0
  %571 = vmatprep.subr.bf16.mxu0 0
  %572 = vmatpush1.bf16.msra.mxu0 0
  %573 = vmatprep.subr.bf16.mxu0 0
  %574 = vmatpush1.bf16.msra.mxu0 0
  %575 = vmatprep.subr.bf16.mxu0 0
  %576 = vmatpush1.bf16.msra.mxu0 0
  %577 = vmatprep.subr.bf16.mxu0 0
  %578 = vmatpush1.bf16.msra.mxu0 0
  %579 = vmatprep.subr.bf16.mxu0 0
  %580 = vmatpush1.bf16.msra.mxu0 0
  %581 = vmatprep.subr.bf16.mxu0 %v545
  %582 = vmatpush1.bf16.msra.mxu0 %v544
  %583 = vmatprep.subr.bf16.mxu0 %v539
  %584 = vmatpush1.bf16.msra.mxu0 %v538
  %585 = vmatprep.subr.bf16.mxu0 0
  %586 = vmatpush2.bf16.msra.mxu0 0
  %587 = vmatprep.subr.bf16.mxu0 0
  %588 = vmatpush2.bf16.msra.mxu0 0
  %589 = vmatprep.subr.bf16.mxu0 0
  %590 = vmatpush2.bf16.msra.mxu0 0
  %591 = vmatprep.subr.bf16.mxu0 0
  %592 = vmatpush2.bf16.msra.mxu0 0
  %593 = vmatprep.subr.bf16.mxu0 0
  %594 = vmatpush2.bf16.msra.mxu0 0
  %595 = vmatprep.subr.bf16.mxu0 0
  %596 = vmatpush2.bf16.msra.mxu0 0
  %597 = vmatprep.subr.bf16.mxu0 0
  %598 = vmatpush2.bf16.msra.mxu0 0
  %599 = vmatprep.subr.bf16.mxu0 0
  %600 = vmatpush2.bf16.msra.mxu0 0
  %601 = vmatprep.mubr.bf16.mxu0 0
  %602 = vmatmul.mubr.bf16.gmra.mxu0 %v564
  %v603 = vpop.f32.mrf.mxu0
  %v604 = vadd.f32 %v378, %v603
  %v605 = vpop.f32.mrf.mxu0
  %v606 = vadd.f32 %v380, %v605
  %v607 = vpop.f32.mrf.mxu0
  %v608 = vadd.f32 %v382, %v607
  %v609 = vpop.f32.mrf.mxu0
  %v610 = vadd.f32 %v384, %v609
  %611 = vmatprep.mubr.bf16.mxu0 0
  %612 = vmatmul.mubr.bf16.gmra.mxu0 %v567
  %v613 = vpop.f32.mrf.mxu0
  %v614 = vadd.f32 %v388, %v613
  %v615 = vpop.f32.mrf.mxu0
  %v616 = vadd.f32 %v390, %v615
  %v617 = vpop.f32.mrf.mxu0
  %v618 = vadd.f32 %v392, %v617
  %v619 = vpop.f32.mrf.mxu0
  %v620 = vadd.f32 %v394, %v619
  %621 = vdwg.mxu0
  %622 = vmatprep.subr.bf16.mxu0 0
  %623 = vmatpush1.bf16.msra.mxu0 0
  %624 = vmatprep.subr.bf16.mxu0 0
  %625 = vmatpush1.bf16.msra.mxu0 0
  %626 = vmatprep.subr.bf16.mxu0 0
  %627 = vmatpush1.bf16.msra.mxu0 0
  %628 = vmatprep.subr.bf16.mxu0 0
  %629 = vmatpush1.bf16.msra.mxu0 0
  %630 = vmatprep.subr.bf16.mxu0 0
  %631 = vmatpush1.bf16.msra.mxu0 0
  %632 = vmatprep.subr.bf16.mxu0 0
  %633 = vmatpush1.bf16.msra.mxu0 0
  %634 = vmatprep.subr.bf16.mxu0 %v547
  %635 = vmatpush1.bf16.msra.mxu0 %v546
  %636 = vmatprep.subr.bf16.mxu0 %v541
  %637 = vmatpush1.bf16.msra.mxu0 %v540
  %638 = vmatprep.subr.bf16.mxu0 0
  %639 = vmatpush2.bf16.msra.mxu0 0
  %640 = vmatprep.subr.bf16.mxu0 0
  %641 = vmatpush2.bf16.msra.mxu0 0
  %642 = vmatprep.subr.bf16.mxu0 0
  %643 = vmatpush2.bf16.msra.mxu0 0
  %644 = vmatprep.subr.bf16.mxu0 0
  %645 = vmatpush2.bf16.msra.mxu0 0
  %646 = vmatprep.subr.bf16.mxu0 0
  %647 = vmatpush2.bf16.msra.mxu0 0
  %648 = vmatprep.subr.bf16.mxu0 0
  %649 = vmatpush2.bf16.msra.mxu0 0
  %650 = vmatprep.subr.bf16.mxu0 0
  %651 = vmatpush2.bf16.msra.mxu0 0
  %652 = vmatprep.subr.bf16.mxu0 0
  %653 = vmatpush2.bf16.msra.mxu0 0
  %654 = vmatprep.mubr.bf16.mxu0 0
  %655 = vmatmul.mubr.bf16.gmra.mxu0 %v564
  %v656 = vpop.f32.mrf.mxu0
  %v657 = vadd.f32 %v431, %v656
  %v658 = vpop.f32.mrf.mxu0
  %v659 = vadd.f32 %v433, %v658
  %v660 = vpop.f32.mrf.mxu0
  %v661 = vadd.f32 %v435, %v660
  %v662 = vpop.f32.mrf.mxu0
  %v663 = vadd.f32 %v437, %v662
  %664 = vmatprep.mubr.bf16.mxu0 0
  %665 = vmatmul.mubr.bf16.gmra.mxu0 %v567
  %v666 = vpop.f32.mrf.mxu0
  %v667 = vadd.f32 %v441, %v666
  %v668 = vpop.f32.mrf.mxu0
  %v669 = vadd.f32 %v443, %v668
  %v670 = vpop.f32.mrf.mxu0
  %v671 = vadd.f32 %v445, %v670
  %v672 = vpop.f32.mrf.mxu0
  %v673 = vadd.f32 %v447, %v672
  %674 = vdwg.mxu0
  %675 = vmatprep.subr.bf16.mxu0 0
  %676 = vmatpush1.bf16.msra.mxu0 0
  %677 = vmatprep.subr.bf16.mxu0 0
  %678 = vmatpush1.bf16.msra.mxu0 0
  %679 = vmatprep.subr.bf16.mxu0 0
  %680 = vmatpush1.bf16.msra.mxu0 0
  %681 = vmatprep.subr.bf16.mxu0 0
  %682 = vmatpush1.bf16.msra.mxu0 0
  %683 = vmatprep.subr.bf16.mxu0 0
  %684 = vmatpush1.bf16.msra.mxu0 0
  %685 = vmatprep.subr.bf16.mxu0 0
  %686 = vmatpush1.bf16.msra.mxu0 0
  %687 = vmatprep.subr.bf16.mxu0 %v549
  %688 = vmatpush1.bf16.msra.mxu0 %v548
  %689 = vmatprep.subr.bf16.mxu0 %v543
  %690 = vmatpush1.bf16.msra.mxu0 %v542
  %691 = vmatprep.subr.bf16.mxu0 0
  %692 = vmatpush2.bf16.msra.mxu0 0
  %693 = vmatprep.subr.bf16.mxu0 0
  %694 = vmatpush2.bf16.msra.mxu0 0
  %695 = vmatprep.subr.bf16.mxu0 0
  %696 = vmatpush2.bf16.msra.mxu0 0
  %697 = vmatprep.subr.bf16.mxu0 0
  %698 = vmatpush2.bf16.msra.mxu0 0
  %699 = vmatprep.subr.bf16.mxu0 0
  %700 = vmatpush2.bf16.msra.mxu0 0
  %701 = vmatprep.subr.bf16.mxu0 0
  %702 = vmatpush2.bf16.msra.mxu0 0
  %703 = vmatprep.subr.bf16.mxu0 0
  %704 = vmatpush2.bf16.msra.mxu0 0
  %705 = vmatprep.subr.bf16.mxu0 0
  %706 = vmatpush2.bf16.msra.mxu0 0
  %707 = vmatprep.mubr.bf16.mxu0 0
  %708 = vmatmul.mubr.bf16.gmra.mxu0 %v564
  %v709 = vpop.f32.mrf.mxu0
  %v710 = vadd.f32 %v484, %v709
  %v711 = vpop.f32.mrf.mxu0
  %v712 = vadd.f32 %v486, %v711
  %v713 = vpop.f32.mrf.mxu0
  %v714 = vadd.f32 %v488, %v713
  %v715 = vpop.f32.mrf.mxu0
  %v716 = vadd.f32 %v490, %v715
  %717 = vmatprep.mubr.bf16.mxu0 0
  %718 = vmatmul.mubr.bf16.gmra.mxu0 %v567
  %v719 = vpop.f32.mrf.mxu0
  %v720 = vadd.f32 %v494, %v719
  %v721 = vpop.f32.mrf.mxu0
  %v722 = vadd.f32 %v496, %v721
  %v723 = vpop.f32.mrf.mxu0
  %v724 = vadd.f32 %v498, %v723
  %v725 = vpop.f32.mrf.mxu0
  %v726 = vadd.f32 %v500, %v725
  %727 = vdwg.mxu0
  %vm728 = vcmp.ne.s32.totalorder %v82, 0
  %vm729 = vcmp.ne.s32.totalorder %v83, 0
  %vm730 = vcmp.ne.s32.totalorder %v84, 0
  %vm731 = vcmp.ne.s32.totalorder %v85, 0
  %v732 = vrot.slane %v604, 7
  %v733 = vrot.slane %v606, 7
  %v734 = vrot.slane %v608, 7
  %v735 = vrot.slane %v610, 7
  %v736 = vrot.slane %v614, 7
  %v737 = vrot.slane %v616, 7
  %v738 = vrot.slane %v618, 7
  %v739 = vrot.slane %v620, 7
  %vm740 = vcmp.lt.s32.totalorder %v34, 1
  %v741 = vsel %vm740, %v736, %v738
  %v742 = vsel %vm740, %v737, %v739
  %v743 = vsel %vm740, %v734, %v736
  %v744 = vsel %vm740, %v735, %v737
  %v745 = vsel %vm740, %v732, %v734
  %v746 = vsel %vm740, %v733, %v735
  %v747 = vsel %vm740, %v738, %v732
  %v748 = vsel %vm740, %v739, %v733
  %v749 = vsel %vm728, %v747, 0.0
  %v750 = vsel %vm728, %v748, 0.0
  %v751 = vsel %vm729, %v745, 0.0
  %v752 = vsel %vm729, %v746, 0.0
  %v753 = vsel %vm730, %v743, 0.0
  %v754 = vsel %vm730, %v744, 0.0
  %v755 = vsel %vm731, %v741, 0.0
  %v756 = vsel %vm731, %v742, 0.0
  %v757 = vadd.f32 %v657, %v749
  %v758 = vadd.f32 %v659, %v750
  %v759 = vadd.f32 %v661, %v751
  %v760 = vadd.f32 %v663, %v752
  %v761 = vadd.f32 %v667, %v753
  %v762 = vadd.f32 %v669, %v754
  %v763 = vadd.f32 %v671, %v755
  %v764 = vadd.f32 %v673, %v756
  %vm765 = vcmp.ne.s32.totalorder %v82, 15
  %vm766 = vcmp.ne.s32.totalorder %v83, 15
  %vm767 = vcmp.ne.s32.totalorder %v84, 15
  %vm768 = vcmp.ne.s32.totalorder %v85, 15
  %v769 = vrot.slane %v710, 1
  %v770 = vrot.slane %v712, 1
  %v771 = vrot.slane %v714, 1
  %v772 = vrot.slane %v716, 1
  %v773 = vrot.slane %v720, 1
  %v774 = vrot.slane %v722, 1
  %v775 = vrot.slane %v724, 1
  %v776 = vrot.slane %v726, 1
  %vm777 = vcmp.lt.s32.totalorder %v34, 7
  %v778 = vsel %vm777, %v773, %v775
  %v779 = vsel %vm777, %v774, %v776
  %v780 = vsel %vm777, %v771, %v773
  %v781 = vsel %vm777, %v772, %v774
  %v782 = vsel %vm777, %v769, %v771
  %v783 = vsel %vm777, %v770, %v772
  %v784 = vsel %vm777, %v775, %v769
  %v785 = vsel %vm777, %v776, %v770
  %v786 = vsel %vm765, %v782, 0.0
  %v787 = vsel %vm765, %v783, 0.0
  %v788 = vsel %vm766, %v780, 0.0
  %v789 = vsel %vm766, %v781, 0.0
  %v790 = vsel %vm767, %v778, 0.0
  %v791 = vsel %vm767, %v779, 0.0
  %v792 = vsel %vm768, %v784, 0.0
  %v793 = vsel %vm768, %v785, 0.0
  %v794 = vadd.f32 %v757, %v786
  %v795 = vadd.f32 %v758, %v787
  %v796 = vadd.f32 %v759, %v788
  %v797 = vadd.f32 %v760, %v789
  %v798 = vadd.f32 %v761, %v790
  %v799 = vadd.f32 %v762, %v791
  %v800 = vadd.f32 %v763, %v792
  %v801 = vadd.f32 %v764, %v793
  %v802 = vld [vmem:[%s5] sm:$0x3]
  %v804 = vlaneseq
  %v805 = vshrl.u32 %v804, 7
  %v806 = vsub.s32 0, %v805
  %v807 = vrot.slane %v802, %v806
  %v808 = vlaneseq
  %v809 = vshrl.u32 %v808, 7
  %v810 = vsub.s32 1, %v809
  %v811 = vrot.slane %v802, %v810
  %v814 = vmul.f32 %v794, %v807
  %v815 = vmul.f32 %v795, %v811
  %v816 = vmul.f32 %v796, %v807
  %v817 = vmul.f32 %v797, %v811
  %v818 = vmul.f32 %v798, %v807
  %v819 = vmul.f32 %v799, %v811
  %v820 = vmul.f32 %v800, %v807
  %v821 = vmul.f32 %v801, %v811
  %v822 = vld [vmem:[%s6] sm:$0x3]
  %v824 = vlaneseq
  %v825 = vshrl.u32 %v824, 7
  %v826 = vsub.s32 0, %v825
  %v827 = vrot.slane %v822, %v826
  %v828 = vlaneseq
  %v829 = vshrl.u32 %v828, 7
  %v830 = vsub.s32 1, %v829
  %v831 = vrot.slane %v822, %v830
  %v834 = vadd.f32 %v814, %v827
  %v835 = vadd.f32 %v815, %v831
  %v836 = vadd.f32 %v816, %v827
  %v837 = vadd.f32 %v817, %v831
  %v838 = vadd.f32 %v818, %v827
  %v839 = vadd.f32 %v819, %v831
  %v840 = vadd.f32 %v820, %v827
  %v841 = vadd.f32 %v821, %v831
  %v842 = vmax.f32 %v834, 0.0
  %v843 = vmax.f32 %v835, 0.0
  %v844 = vmax.f32 %v836, 0.0
  %v845 = vmax.f32 %v837, 0.0
  %v846 = vmax.f32 %v838, 0.0
  %v847 = vmax.f32 %v839, 0.0
  %v848 = vmax.f32 %v840, 0.0
  %v849 = vmax.f32 %v841, 0.0
  %v850 = vpack.c.bf16 %v844, %v842
  %v851 = vpack.c.bf16 %v845, %v843
  %v852 = vpack.c.bf16 %v848, %v846
  %v853 = vpack.c.bf16 %v849, %v847
  %v854 = vld [vmem:[%s7] sm:$0xff]
  %v855 = vld [vmem:[%s7 + $0x8] sm:$0xf]
  %v856 = vld [vmem:[%s7 + $0xc] sm:$0xff]
  %v857 = vld [vmem:[%s7 + $0x14] sm:$0xf]
  %v858 = vld [vmem:[%s7 + $0x18] sm:$0xff]
  %v859 = vld [vmem:[%s7 + $0x20] sm:$0xf]
  %v860 = vld [vmem:[%s7 + $0x24] sm:$0xff]
  %v861 = vld [vmem:[%s7 + $0x2c] sm:$0xf]
  %v862 = vld [vmem:[%s7 + $0x30] sm:$0xff]
  %v863 = vld [vmem:[%s7 + $0x38] sm:$0xf]
  %v864 = vld [vmem:[%s7 + $0x3c] sm:$0xff]
  %v865 = vld [vmem:[%s7 + $0x44] sm:$0xf]
  %v866 = vld [vmem:[%s7 + $0x48] sm:$0xff]
  %v867 = vld [vmem:[%s7 + $0x50] sm:$0xf]
  %v868 = vld [vmem:[%s7 + $0x54] sm:$0xff]
  %v869 = vld [vmem:[%s7 + $0x5c] sm:$0xf]
  %v870 = vld [vmem:[%s7 + $0x60] sm:$0xff]
  %v871 = vld [vmem:[%s7 + $0x68] sm:$0xf]
  %v872 = vld [vmem:[%s7 + $0x6c] sm:$0xff]
  %v873 = vld [vmem:[%s7 + $0x74] sm:$0xf]
  %v874 = vld [vmem:[%s7 + $0x78] sm:$0xff]
  %v875 = vld [vmem:[%s7 + $0x80] sm:$0xf]
  %v876 = vld [vmem:[%s7 + $0x84] sm:$0xff]
  %v877 = vld [vmem:[%s7 + $0x8c] sm:$0xf]
  %v878 = vld [vmem:[%s7 + $0x90] sm:$0xff]
  %v879 = vld [vmem:[%s7 + $0x98] sm:$0xf]
  %v880 = vld [vmem:[%s7 + $0x9c] sm:$0xff]
  %v881 = vld [vmem:[%s7 + $0xa4] sm:$0xf]
  %v882 = vld [vmem:[%s7 + $0xa8] sm:$0xff]
  %v883 = vld [vmem:[%s7 + $0xb0] sm:$0xf]
  %v884 = vld [vmem:[%s7 + $0xb4] sm:$0xff]
  %v885 = vld [vmem:[%s7 + $0xbc] sm:$0xf]
  %v886 = vld [vmem:[%s7 + $0xc0] sm:$0xff]
  %v887 = vld [vmem:[%s7 + $0xc8] sm:$0xf]
  %v888 = vld [vmem:[%s7 + $0xcc] sm:$0xff]
  %v889 = vld [vmem:[%s7 + $0xd4] sm:$0xf]
  %v890 = vld [vmem:[%s7 + $0xd8] sm:$0xff]
  %v891 = vld [vmem:[%s7 + $0xe0] sm:$0xf]
  %v892 = vld [vmem:[%s7 + $0xe4] sm:$0xff]
  %v893 = vld [vmem:[%s7 + $0xec] sm:$0xf]
  %v894 = vld [vmem:[%s7 + $0xf0] sm:$0xff]
  %v895 = vld [vmem:[%s7 + $0xf8] sm:$0xf]
  %v896 = vld [vmem:[%s7 + $0xfc] sm:$0xff]
  %v897 = vld [vmem:[%s7 + $0x104] sm:$0xf]
  %v898 = vld [vmem:[%s7 + $0x108] sm:$0xff]
  %v899 = vld [vmem:[%s7 + $0x110] sm:$0xf]
  %v900 = vld [vmem:[%s7 + $0x114] sm:$0xff]
  %v901 = vld [vmem:[%s7 + $0x11c] sm:$0xf]
  %v902 = vld [vmem:[%s7 + $0x120] sm:$0xff]
  %v903 = vld [vmem:[%s7 + $0x128] sm:$0xf]
  %v904 = vld [vmem:[%s7 + $0x12c] sm:$0xff]
  %v905 = vld [vmem:[%s7 + $0x134] sm:$0xf]
  %v906 = vld [vmem:[%s7 + $0x138] sm:$0xff]
  %v907 = vld [vmem:[%s7 + $0x140] sm:$0xf]
  %v908 = vld [vmem:[%s7 + $0x144] sm:$0xff]
  %v909 = vld [vmem:[%s7 + $0x14c] sm:$0xf]
  %v910 = vld [vmem:[%s7 + $0x150] sm:$0xff]
  %v911 = vld [vmem:[%s7 + $0x158] sm:$0xf]
  %v912 = vld [vmem:[%s7 + $0x15c] sm:$0xff]
  %v913 = vld [vmem:[%s7 + $0x164] sm:$0xf]
  %v914 = vld [vmem:[%s7 + $0x168] sm:$0xff]
  %v915 = vld [vmem:[%s7 + $0x170] sm:$0xf]
  %v916 = vld [vmem:[%s7 + $0x174] sm:$0xff]
  %v917 = vld [vmem:[%s7 + $0x17c] sm:$0xf]
  %v982 = vunpack.c.l.b16 %v854
  %v983 = vunpack.c.h.b16 %v854
  %v984 = vunpack.c.l.b16 %v855
  %v985 = vunpack.c.l.b16 %v856
  %v986 = vunpack.c.h.b16 %v856
  %v987 = vunpack.c.l.b16 %v857
  %v988 = vunpack.c.l.b16 %v858
  %v989 = vunpack.c.h.b16 %v858
  %v990 = vunpack.c.l.b16 %v859
  %v991 = vunpack.c.l.b16 %v860
  %v992 = vunpack.c.h.b16 %v860
  %v993 = vunpack.c.l.b16 %v861
  %v994 = vunpack.c.l.b16 %v862
  %v995 = vunpack.c.h.b16 %v862
  %v996 = vunpack.c.l.b16 %v863
  %v997 = vunpack.c.l.b16 %v864
  %v998 = vunpack.c.h.b16 %v864
  %v999 = vunpack.c.l.b16 %v865
  %v1000 = vunpack.c.l.b16 %v866
  %v1001 = vunpack.c.h.b16 %v866
  %v1002 = vunpack.c.l.b16 %v867
  %v1003 = vunpack.c.l.b16 %v868
  %v1004 = vunpack.c.h.b16 %v868
  %v1005 = vunpack.c.l.b16 %v869
  %v1006 = vunpack.c.l.b16 %v870
  %v1007 = vunpack.c.h.b16 %v870
  %v1008 = vunpack.c.l.b16 %v871
  %v1009 = vunpack.c.l.b16 %v872
  %v1010 = vunpack.c.h.b16 %v872
  %v1011 = vunpack.c.l.b16 %v873
  %v1012 = vunpack.c.l.b16 %v874
  %v1013 = vunpack.c.h.b16 %v874
  %v1014 = vunpack.c.l.b16 %v875
  %v1015 = vunpack.c.l.b16 %v876
  %v1016 = vunpack.c.h.b16 %v876
  %v1017 = vunpack.c.l.b16 %v877
  %v1018 = vunpack.c.l.b16 %v878
  %v1019 = vunpack.c.h.b16 %v878
  %v1020 = vunpack.c.l.b16 %v879
  %v1021 = vunpack.c.l.b16 %v880
  %v1022 = vunpack.c.h.b16 %v880
  %v1023 = vunpack.c.l.b16 %v881
  %v1024 = vunpack.c.l.b16 %v882
  %v1025 = vunpack.c.h.b16 %v882
  %v1026 = vunpack.c.l.b16 %v883
  %v1027 = vunpack.c.l.b16 %v884
  %v1028 = vunpack.c.h.b16 %v884
  %v1029 = vunpack.c.l.b16 %v885
  %v1030 = vunpack.c.l.b16 %v886
  %v1031 = vunpack.c.h.b16 %v886
  %v1032 = vunpack.c.l.b16 %v887
  %v1033 = vunpack.c.l.b16 %v888
  %v1034 = vunpack.c.h.b16 %v888
  %v1035 = vunpack.c.l.b16 %v889
  %v1036 = vunpack.c.l.b16 %v890
  %v1037 = vunpack.c.h.b16 %v890
  %v1038 = vunpack.c.l.b16 %v891
  %v1039 = vunpack.c.l.b16 %v892
  %v1040 = vunpack.c.h.b16 %v892
  %v1041 = vunpack.c.l.b16 %v893
  %v1042 = vunpack.c.l.b16 %v894
  %v1043 = vunpack.c.h.b16 %v894
  %v1044 = vunpack.c.l.b16 %v895
  %v1045 = vunpack.c.l.b16 %v896
  %v1046 = vunpack.c.h.b16 %v896
  %v1047 = vunpack.c.l.b16 %v897
  %v1048 = vunpack.c.l.b16 %v898
  %v1049 = vunpack.c.h.b16 %v898
  %v1050 = vunpack.c.l.b16 %v899
  %v1051 = vunpack.c.l.b16 %v900
  %v1052 = vunpack.c.h.b16 %v900
  %v1053 = vunpack.c.l.b16 %v901
  %v1054 = vunpack.c.l.b16 %v902
  %v1055 = vunpack.c.h.b16 %v902
  %v1056 = vunpack.c.l.b16 %v903
  %v1057 = vunpack.c.l.b16 %v904
  %v1058 = vunpack.c.h.b16 %v904
  %v1059 = vunpack.c.l.b16 %v905
  %v1060 = vunpack.c.l.b16 %v906
  %v1061 = vunpack.c.h.b16 %v906
  %v1062 = vunpack.c.l.b16 %v907
  %v1063 = vunpack.c.l.b16 %v908
  %v1064 = vunpack.c.h.b16 %v908
  %v1065 = vunpack.c.l.b16 %v909
  %v1066 = vunpack.c.l.b16 %v910
  %v1067 = vunpack.c.h.b16 %v910
  %v1068 = vunpack.c.l.b16 %v911
  %v1069 = vunpack.c.l.b16 %v912
  %v1070 = vunpack.c.h.b16 %v912
  %v1071 = vunpack.c.l.b16 %v913
  %v1072 = vunpack.c.l.b16 %v914
  %v1073 = vunpack.c.h.b16 %v914
  %v1074 = vunpack.c.l.b16 %v915
  %v1075 = vunpack.c.l.b16 %v916
  %v1076 = vunpack.c.h.b16 %v916
  %v1077 = vunpack.c.l.b16 %v917
  %v1078 = vpack.c.b16 %v985, %v982
  %v1079 = vpack.c.b16 %v986, %v983
  %v1080 = vpack.c.b16 %v987, %v984
  %v1081 = vpack.c.b16 %v991, %v988
  %v1082 = vpack.c.b16 %v992, %v989
  %v1083 = vpack.c.b16 %v993, %v990
  %v1084 = vpack.c.b16 %v997, %v994
  %v1085 = vpack.c.b16 %v998, %v995
  %v1086 = vpack.c.b16 %v999, %v996
  %v1087 = vpack.c.b16 %v1003, %v1000
  %v1088 = vpack.c.b16 %v1004, %v1001
  %v1089 = vpack.c.b16 %v1005, %v1002
  %v1090 = vpack.c.b16 %v1009, %v1006
  %v1091 = vpack.c.b16 %v1010, %v1007
  %v1092 = vpack.c.b16 %v1011, %v1008
  %v1093 = vpack.c.b16 %v1015, %v1012
  %v1094 = vpack.c.b16 %v1016, %v1013
  %v1095 = vpack.c.b16 %v1017, %v1014
  %v1096 = vpack.c.b16 %v1021, %v1018
  %v1097 = vpack.c.b16 %v1022, %v1019
  %v1098 = vpack.c.b16 %v1023, %v1020
  %v1099 = vpack.c.b16 %v1027, %v1024
  %v1100 = vpack.c.b16 %v1028, %v1025
  %v1101 = vpack.c.b16 %v1029, %v1026
  %v1102 = vpack.c.b16 %v1033, %v1030
  %v1103 = vpack.c.b16 %v1034, %v1031
  %v1104 = vpack.c.b16 %v1035, %v1032
  %v1105 = vpack.c.b16 %v1039, %v1036
  %v1106 = vpack.c.b16 %v1040, %v1037
  %v1107 = vpack.c.b16 %v1041, %v1038
  %v1108 = vpack.c.b16 %v1045, %v1042
  %v1109 = vpack.c.b16 %v1046, %v1043
  %v1110 = vpack.c.b16 %v1047, %v1044
  %v1111 = vpack.c.b16 %v1051, %v1048
  %v1112 = vpack.c.b16 %v1052, %v1049
  %v1113 = vpack.c.b16 %v1053, %v1050
  %v1114 = vpack.c.b16 %v1057, %v1054
  %v1115 = vpack.c.b16 %v1058, %v1055
  %v1116 = vpack.c.b16 %v1059, %v1056
  %v1117 = vpack.c.b16 %v1063, %v1060
  %v1118 = vpack.c.b16 %v1064, %v1061
  %v1119 = vpack.c.b16 %v1065, %v1062
  %v1120 = vpack.c.b16 %v1069, %v1066
  %v1121 = vpack.c.b16 %v1070, %v1067
  %v1122 = vpack.c.b16 %v1071, %v1068
  %v1123 = vpack.c.b16 %v1075, %v1072
  %v1124 = vpack.c.b16 %v1076, %v1073
  %v1125 = vpack.c.b16 %v1077, %v1074
  %1174 = vmatprep.subr.bf16.mxu0 %v1100
  %1175 = vmatpush1.bf16.msra.mxu0 %v1099
  %1176 = vmatprep.subr.bf16.mxu0 %v1097
  %1177 = vmatpush1.bf16.msra.mxu0 %v1096
  %1178 = vmatprep.subr.bf16.mxu0 %v1094
  %1179 = vmatpush1.bf16.msra.mxu0 %v1093
  %1180 = vmatprep.subr.bf16.mxu0 %v1091
  %1181 = vmatpush1.bf16.msra.mxu0 %v1090
  %1182 = vmatprep.subr.bf16.mxu0 %v1088
  %1183 = vmatpush1.bf16.msra.mxu0 %v1087
  %1184 = vmatprep.subr.bf16.mxu0 %v1085
  %1185 = vmatpush1.bf16.msra.mxu0 %v1084
  %1186 = vmatprep.subr.bf16.mxu0 %v1082
  %1187 = vmatpush1.bf16.msra.mxu0 %v1081
  %1188 = vmatprep.subr.bf16.mxu0 %v1079
  %1189 = vmatpush1.bf16.msra.mxu0 %v1078
  %1190 = vmatprep.subr.bf16.mxu0 %v1124
  %1191 = vmatpush2.bf16.msra.mxu0 %v1123
  %1192 = vmatprep.subr.bf16.mxu0 %v1121
  %1193 = vmatpush2.bf16.msra.mxu0 %v1120
  %1194 = vmatprep.subr.bf16.mxu0 %v1118
  %1195 = vmatpush2.bf16.msra.mxu0 %v1117
  %1196 = vmatprep.subr.bf16.mxu0 %v1115
  %1197 = vmatpush2.bf16.msra.mxu0 %v1114
  %1198 = vmatprep.subr.bf16.mxu0 %v1112
  %1199 = vmatpush2.bf16.msra.mxu0 %v1111
  %1200 = vmatprep.subr.bf16.mxu0 %v1109
  %1201 = vmatpush2.bf16.msra.mxu0 %v1108
  %1202 = vmatprep.subr.bf16.mxu0 %v1106
  %1203 = vmatpush2.bf16.msra.mxu0 %v1105
  %1204 = vmatprep.subr.bf16.mxu0 %v1103
  %1205 = vmatpush2.bf16.msra.mxu0 %v1102
  %1206 = vmatprep.mubr.bf16.mxu0 %v851
  %1207 = vmatmul.mubr.bf16.gmra.mxu0 %v850
  %v1208 = vpop.f32.mrf.mxu0
  %v1209 = vadd.f32 0.0, %v1208
  %v1210 = vpop.f32.mrf.mxu0
  %v1211 = vadd.f32 0.0, %v1210
  %v1212 = vpop.f32.mrf.mxu0
  %v1213 = vadd.f32 0.0, %v1212
  %v1214 = vpop.f32.mrf.mxu0
  %v1215 = vadd.f32 0.0, %v1214
  %1216 = vmatprep.mubr.bf16.mxu0 %v853
  %1217 = vmatmul.mubr.bf16.gmra.mxu0 %v852
  %v1218 = vpop.f32.mrf.mxu0
  %v1219 = vadd.f32 0.0, %v1218
  %v1220 = vpop.f32.mrf.mxu0
  %v1221 = vadd.f32 0.0, %v1220
  %v1222 = vpop.f32.mrf.mxu0
  %v1223 = vadd.f32 0.0, %v1222
  %v1224 = vpop.f32.mrf.mxu0
  %v1225 = vadd.f32 0.0, %v1224
  %1226 = vdwg.mxu0
  %1227 = vmatprep.subr.bf16.mxu0 0
  %1228 = vmatpush1.bf16.msra.mxu0 %v1101
  %1229 = vmatprep.subr.bf16.mxu0 0
  %1230 = vmatpush1.bf16.msra.mxu0 %v1098
  %1231 = vmatprep.subr.bf16.mxu0 0
  %1232 = vmatpush1.bf16.msra.mxu0 %v1095
  %1233 = vmatprep.subr.bf16.mxu0 0
  %1234 = vmatpush1.bf16.msra.mxu0 %v1092
  %1235 = vmatprep.subr.bf16.mxu0 0
  %1236 = vmatpush1.bf16.msra.mxu0 %v1089
  %1237 = vmatprep.subr.bf16.mxu0 0
  %1238 = vmatpush1.bf16.msra.mxu0 %v1086
  %1239 = vmatprep.subr.bf16.mxu0 0
  %1240 = vmatpush1.bf16.msra.mxu0 %v1083
  %1241 = vmatprep.subr.bf16.mxu0 0
  %1242 = vmatpush1.bf16.msra.mxu0 %v1080
  %1243 = vmatprep.subr.bf16.mxu0 0
  %1244 = vmatpush2.bf16.msra.mxu0 %v1125
  %1245 = vmatprep.subr.bf16.mxu0 0
  %1246 = vmatpush2.bf16.msra.mxu0 %v1122
  %1247 = vmatprep.subr.bf16.mxu0 0
  %1248 = vmatpush2.bf16.msra.mxu0 %v1119
  %1249 = vmatprep.subr.bf16.mxu0 0
  %1250 = vmatpush2.bf16.msra.mxu0 %v1116
  %1251 = vmatprep.subr.bf16.mxu0 0
  %1252 = vmatpush2.bf16.msra.mxu0 %v1113
  %1253 = vmatprep.subr.bf16.mxu0 0
  %1254 = vmatpush2.bf16.msra.mxu0 %v1110
  %1255 = vmatprep.subr.bf16.mxu0 0
  %1256 = vmatpush2.bf16.msra.mxu0 %v1107
  %1257 = vmatprep.subr.bf16.mxu0 0
  %1258 = vmatpush2.bf16.msra.mxu0 %v1104
  %1259 = vmatprep.mubr.bf16.mxu0 %v851
  %1260 = vmatmul.mubr.bf16.gmra.mxu0 %v850
  %v1261 = vpop.f32.mrf.mxu0
  %v1262 = vadd.f32 0.0, %v1261
  %v1263 = vpop.f32.mrf.mxu0
  %v1264 = vpop.f32.mrf.mxu0
  %v1265 = vadd.f32 0.0, %v1264
  %v1266 = vpop.f32.mrf.mxu0
  %1267 = vmatprep.mubr.bf16.mxu0 %v853
  %1268 = vmatmul.mubr.bf16.gmra.mxu0 %v852
  %v1269 = vpop.f32.mrf.mxu0
  %v1270 = vadd.f32 0.0, %v1269
  %v1271 = vpop.f32.mrf.mxu0
  %v1272 = vpop.f32.mrf.mxu0
  %v1273 = vadd.f32 0.0, %v1272
  %v1274 = vpop.f32.mrf.mxu0
  %1275 = vdwg.mxu0
  %v1276 = vrot.slane %v1209, 7
  %v1277 = vrot.slane %v1213, 7
  %v1278 = vrot.slane %v1219, 7
  %v1279 = vrot.slane %v1223, 7
  %v1280 = vsel %vm740, %v1278, %v1279
  %v1281 = vsel %vm740, %v1277, %v1278
  %v1282 = vsel %vm740, %v1276, %v1277
  %v1283 = vsel %vm740, %v1279, %v1276
  %v1284 = vsel %vm728, %v1283, 0.0
  %v1285 = vsel %vm729, %v1282, 0.0
  %v1286 = vsel %vm730, %v1281, 0.0
  %v1287 = vsel %vm731, %v1280, 0.0
  %v1288 = vadd.f32 %v1211, %v1284
  %v1289 = vadd.f32 %v1215, %v1285
  %v1290 = vadd.f32 %v1221, %v1286
  %v1291 = vadd.f32 %v1225, %v1287
  %v1292 = vrot.slane %v1262, 1
  %v1293 = vrot.slane %v1265, 1
  %v1294 = vrot.slane %v1270, 1
  %v1295 = vrot.slane %v1273, 1
  %v1296 = vsel %vm777, %v1294, %v1295
  %v1297 = vsel %vm777, %v1293, %v1294
  %v1298 = vsel %vm777, %v1292, %v1293
  %v1299 = vsel %vm777, %v1295, %v1292
  %v1300 = vsel %vm765, %v1298, 0.0
  %v1301 = vsel %vm766, %v1297, 0.0
  %v1302 = vsel %vm767, %v1296, 0.0
  %v1303 = vsel %vm768, %v1299, 0.0
  %v1304 = vadd.f32 %v1288, %v1300
  %v1305 = vadd.f32 %v1289, %v1301
  %v1306 = vadd.f32 %v1290, %v1302
  %v1307 = vadd.f32 %v1291, %v1303
  %v1308 = vld [vmem:[%s8] sm:$0x1]
  %v1310 = vlaneseq
  %v1311 = vshrl.u32 %v1310, 7
  %v1312 = vsub.s32 0, %v1311
  %v1313 = vrot.slane %v1308, %v1312
  %v1315 = vadd.f32 %v1304, %v1313
  %v1316 = vadd.f32 %v1305, %v1313
  %v1317 = vadd.f32 %v1306, %v1313
  %v1318 = vadd.f32 %v1307, %v1313
  %1319 = vst [vmem:[%s9] sm:$0xff] %v1315
  %1320 = vst [vmem:[%s9 + $0x8] sm:$0xff] %v1316
  %1321 = vst [vmem:[%s9 + $0x10] sm:$0xff] %v1317
  %1322 = vst [vmem:[%s9 + $0x18] sm:$0xff] %v1318
  // Predicated region
  $region38: #{fwd.1} parent=0 // pred_check
    _
  $region39: #{fwd.1} parent=0 // pred_check_branch
    %1324 = sbr.rel (0) target = $region41
  $region40: #{fwd.1} parent=0 // pred_region
    _
  $region41: #{fwd.1} parent=0 // pred_fallthru
    _
  // Predicated region
  $region42: #{fwd.1} parent=0 // pred_check
    _
  $region43: #{fwd.1} parent=0 // pred_check_branch
    %1326 = sbr.rel (0) target = $region45
  $region44: #{fwd.1} parent=0 // pred_region
    _
  $region45: #{fwd.1} parent=0 // pred_fallthru
    _

</llo_original>
